<compile_context>
chip_gen: v5e
topology: v5e:2x2
jax: 0.10.0
libtpu: 0.0.40
codegen_flags: <defaults>
</compile_context>

<pallas_src>
import functools

import jax
import jax.numpy as jnp
from jax.experimental import pallas as pl
from jax.experimental.pallas import tpu as pltpu


# ---------------------------------------------------------------------------
# Wrapper-side weight folding (tiny arrays).
# ---------------------------------------------------------------------------
def _fold_weights(w_oihw):
    """Fold 3x3 conv weights (OIHW) into per-parity 2x2 weights.

    Returns (dy, dx, C_out, ry, rx, C_in).  Output pixel (2p+dy, 2q+dx) of
    upsample(x2 nearest) -> conv3x3(pad=1) equals
        sum_{ry,rx} wfold[dy,dx,:,ry,rx,:] . x_pad[p+dy+ry, q+dx+rx, :]
    where x_pad is the ORIGINAL-resolution input zero-padded by 1.
    """
    w = w_oihw
    # Fold kh -> (dy, ry)
    wh = jnp.stack(
        [
            jnp.stack([w[:, :, 0], w[:, :, 1] + w[:, :, 2]], axis=2),
            jnp.stack([w[:, :, 0] + w[:, :, 1], w[:, :, 2]], axis=2),
        ],
        axis=2,
    )                                             # (O, I, dy, ry, kw)
    # Fold kw -> (dx, rx)
    wf = jnp.stack(
        [
            jnp.stack([wh[..., 0], wh[..., 1] + wh[..., 2]], axis=-1),
            jnp.stack([wh[..., 0] + wh[..., 1], wh[..., 2]], axis=-1),
        ],
        axis=4,
    )                                             # (O, I, dy, ry, dx, rx)
    return jnp.transpose(wf, (2, 4, 0, 3, 5, 1))  # (dy, dx, O, ry, rx, I)


def _fused_weight(wfold, C_out, C_in):
    """Scatter per-parity 2x2 weights into one (4*C_out, 9*C_in) matrix (zeros elsewhere)."""
    wz = jnp.zeros((2, 2, C_out, 3, 3, C_in), wfold.dtype)
    for dy in range(2):
        for dx in range(2):
            for ry in range(2):
                for rx in range(2):
                    wz = wz.at[dy, dx, :, dy + ry, dx + rx, :].set(wfold[dy, dx, :, ry, rx, :])
    return wz.reshape(4 * C_out, 9 * C_in)


def _per_parity_weight(wfold, C_out, C_in):
    """(4 parity, 4 tap, C_out, C_in) layout for the split-K path (no lane slicing in-kernel)."""
    return jnp.transpose(wfold, (0, 1, 3, 4, 2, 5)).reshape(4, 4, C_out, C_in)


# ---------------------------------------------------------------------------
# VMEM budgeting / band sizing.
# ---------------------------------------------------------------------------
def _vmem_capacity_bytes():
    try:
        info = pltpu.get_tpu_info()
        cap = getattr(info, "vmem_capacity_bytes", None)
        if cap:
            return int(cap)
    except Exception:
        pass
    return 64 * 1024 * 1024  # conservative default: v7x per-TensorCore VMEM


def _vmem_need_bytes(band_h, W, C_in, C_out, in_item, out_item):
    L = band_h * W
    in_blk = (band_h + 2) * (W + 2) * C_in * in_item
    out_blk = 4 * C_out * L * out_item
    w_blk = 4 * C_out * 9 * C_in * in_item + 4 * C_out * 4
    # In-kernel temporaries: 9 taps / patch (compute dtype) + f32 accumulator.
    scratch = L * (2 * 9 * C_in * in_item + 4 * C_out * 4)
    return 2 * (in_blk + out_blk + w_blk) + scratch   # 2x: auto double-buffering


def _pick_band_rows(H, W, C_in, C_out, in_item, out_item, budget):
    """Largest row band b | H that is BlockSpec-legal (b == H or (b*W) % 128 == 0) and fits VMEM."""
    legal = [b for b in range(1, H + 1)
             if H % b == 0 and (b == H or (b * W) % 128 == 0)]
    fitting = [b for b in legal
               if _vmem_need_bytes(b, W, C_in, C_out, in_item, out_item) <= budget]
    return max(fitting) if fitting else min(legal)


# ---------------------------------------------------------------------------
# Kernel.
# ---------------------------------------------------------------------------
def _make_kernel(band_h, W, C_in, C_out, fuse):
    L = band_h * W

    def kernel(x_ref, w_ref, b_ref, o_ref):
        # x_ref: (band_h+2, W+2, C_in)  halo'd band of the zero-padded original-res image
        # b_ref: (4*C_out, 1)           parity-tiled bias (f32)
        # o_ref: (4*C_out, L)           parity-major channels on sublanes, spatial on lanes
        # The 9 distinct 3x3-neighbourhood taps, built once per band, shared by all parities.
        taps = [[x_ref[pl.ds(ty, band_h), pl.ds(tx, W), :].reshape(L, C_in)
                 for tx in range(3)] for ty in range(3)]

        if fuse:
            # One matmul for all 4 parities: (4*C_out, 9*C_in) . (L, 9*C_in)^T -> (4*C_out, L).
            patch = jnp.concatenate(
                [taps[ty][tx] for ty in range(3) for tx in range(3)], axis=-1)
            acc = jax.lax.dot_general(
                w_ref[...], patch,
                dimension_numbers=(((1,), (1,)), ((), ())),
                preferred_element_type=jnp.float32)
            o_ref[...] = jnp.maximum(acc + b_ref[...], 0.0).astype(o_ref.dtype)
        else:
            # Per-parity split-K accumulating dots (K = C_in each), no lane-concat temporary.
            for dy in range(2):
                for dx in range(2):
                    p = 2 * dy + dx
                    acc = None
                    for ry in range(2):
                        for rx in range(2):
                            d = jax.lax.dot_general(
                                w_ref[p, 2 * ry + rx], taps[dy + ry][dx + rx],
                                dimension_numbers=(((1,), (1,)), ((), ())),
                                preferred_element_type=jnp.float32)
                            acc = d if acc is None else acc + d
                    acc = acc + b_ref[pl.ds(p * C_out, C_out), :]
                    o_ref[pl.ds(p * C_out, C_out), :] = (
                        jnp.maximum(acc, 0.0).astype(o_ref.dtype))

    return kernel


# ---------------------------------------------------------------------------
# Public wrapper.
# ---------------------------------------------------------------------------
@functools.partial(jax.jit, static_argnames=("band_rows", "compute_dtype", "fuse_parities"))
def unet_decoder_block(x_nchw, weight_oihw, bias, *, band_rows=None, compute_dtype=None,
                       fuse_parities=None):
    """UnetDecoderBlock.forward: Upsample(scale=2, nearest) -> Conv2d(3x3, pad=1) -> ReLU.

    x_nchw (N, C_in, H, W), weight (C_out, C_in, 3, 3), bias (C_out,) -> (N, C_out, 2H, 2W).
    compute_dtype=jnp.bfloat16 is recommended on v5e/v6e/v7x (f32 accumulation is kept).
    """
    N, C_in, H, W = x_nchw.shape
    C_out = weight_oihw.shape[0]
    out_dtype = x_nchw.dtype
    cdt = compute_dtype if compute_dtype is not None else x_nchw.dtype
    in_item = jnp.dtype(cdt).itemsize
    out_item = jnp.dtype(out_dtype).itemsize

    # Fuse all 4 parities into one matmul when the per-parity K (4*C_in) underfills the MXU;
    # at large C_in the per-parity split-K path avoids the 2.25x zero-MAC overhead.
    fuse = fuse_parities if fuse_parities is not None else (4 * C_in < 128)

    # --- band sizing from the actual per-generation VMEM budget (v7x = 64 MiB aware) ---------
    cap = _vmem_capacity_bytes()
    vmem_limit = min(int(cap * 0.8), 100 * 1024 * 1024)
    budget = min(int(cap * 0.6), vmem_limit - 4 * 1024 * 1024)
    band_h = band_rows if band_rows is not None else _pick_band_rows(
        H, W, C_in, C_out, in_item, out_item, budget)
    assert H % band_h == 0, (H, band_h)
    n_bands = H // band_h
    L = band_h * W
    # NOTE: if band_h == H and H*W is not a multiple of 128, stores are masked (perf-only hazard).

    # --- folded weights / bias (tiny, wrapper-side, summed in f32 before any cast) -----------
    wfold = _fold_weights(weight_oihw.astype(jnp.float32))
    if fuse:
        w_arr = _fused_weight(wfold, C_out, C_in).astype(cdt)        # (4*C_out, 9*C_in)
        w_spec = pl.BlockSpec(w_arr.shape, lambda n, j: (0, 0))
    else:
        w_arr = _per_parity_weight(wfold, C_out, C_in).astype(cdt)   # (4, 4, C_out, C_in)
        w_spec = pl.BlockSpec(w_arr.shape, lambda n, j: (0, 0, 0, 0))
    b_arr = jnp.tile(bias.astype(jnp.float32).reshape(1, C_out, 1),
                     (4, 1, 1)).reshape(4 * C_out, 1)

    # --- input: padded original-res NHWC, laid out as halo'd row bands -----------------------
    # TODO(synk): fold the 1-px zero pad + halo banding + NCHW->NHWC transpose into the kernel
    # (masked edge loads / pl.Element halo blocks) to save this wrapper-side input pass.
    x_nhwc = jnp.transpose(x_nchw, (0, 2, 3, 1)).astype(cdt)
    x_pad = jnp.pad(x_nhwc, ((0, 0), (1, 1), (1, 1), (0, 0)))          # (N, H+2, W+2, C_in)
    if n_bands == 1:
        x_banded = x_pad[:, None]                                       # (N, 1, H+2, W+2, C_in)
    else:
        rows = jnp.arange(n_bands)[:, None] * band_h + jnp.arange(band_h + 2)[None, :]
        x_banded = x_pad[:, rows]                                       # (N, nb, band_h+2, W+2, C_in)

    kernel = _make_kernel(band_h, W, C_in, C_out, fuse)

    y = pl.pallas_call(
        kernel,
        out_shape=jax.ShapeDtypeStruct((N, 4 * C_out, H * W), out_dtype),
        grid_spec=pltpu.PrefetchScalarGridSpec(
            num_scalar_prefetch=0,
            grid=(N, n_bands),
            in_specs=[
                # One halo'd band per grid step (auto double-buffered) instead of the whole image.
                pl.BlockSpec((pl.Squeezed(), pl.Squeezed(), band_h + 2, W + 2, C_in),
                             lambda n, j: (n, j, 0, 0, 0)),
                w_spec,
                pl.BlockSpec((4 * C_out, 1), lambda n, j: (0, 0)),
            ],
            # Lane-dense output band: last dim = band_h*W (multiple of 128 or full extent).
            out_specs=pl.BlockSpec((pl.Squeezed(), 4 * C_out, L), lambda n, j: (n, 0, j)),
        ),
        compiler_params=pltpu.CompilerParams(
            dimension_semantics=("parallel", "parallel"),
            vmem_limit_bytes=vmem_limit,
        ),
    )(x_banded, w_arr, b_arr)

    # Un-interleave parities back to NCHW: y[n, (2dy+dx)*C_out+o, p*W+q] -> out[n, o, 2p+dy, 2q+dx].
    y = y.reshape(N, 2, 2, C_out, H, W)
    y = jnp.transpose(y, (0, 3, 4, 1, 5, 2))                # (N, C_out, H, dy, W, dx)
    return y.reshape(N, C_out, 2 * H, 2 * W)


if __name__ == "__main__":
    key = jax.random.PRNGKey(0)
    k_x, k_w, k_b = jax.random.split(key, 3)

    # Small shapes consistent with the module: N=2, in_channels=4, out_channels=8, 16x16 spatial.
    N, C_in, C_out, H, W = 2, 4, 8, 16, 16
    x = jax.random.normal(k_x, (N, C_in, H, W), dtype=jnp.float32)
    weight = 0.1 * jax.random.normal(k_w, (C_out, C_in, 3, 3), dtype=jnp.float32)
    bias = 0.05 * jax.random.normal(k_b, (C_out,), dtype=jnp.float32)

    # Pure-JAX reference: nearest x2 upsample -> 3x3 SAME conv -> ReLU.
    x_up = jnp.repeat(jnp.repeat(x, 2, axis=2), 2, axis=3)
    ref = jax.lax.conv_general_dilated(
        x_up, weight, window_strides=(1, 1), padding="SAME",
        dimension_numbers=("NCHW", "OIHW", "NCHW"))
    ref = jnp.maximum(ref + bias[None, :, None, None], 0.0)

    # 1) Default path: auto band (full image here -> 1 band), fused small-channel matmul, f32.
    out = jax.block_until_ready(unet_decoder_block(x, weight, bias))
    assert out.shape == (N, C_out, 2 * H, 2 * W), out.shape
    err = float(jnp.max(jnp.abs(out - ref)))
    assert err < 1e-4, f"fused/f32 max abs error {err}"

    # 2) Multi-band halo path + per-parity split-K kernel (large-channel codepath), f32.
    out2 = jax.block_until_ready(
        unet_decoder_block(x, weight, bias, band_rows=8, fuse_parities=False))
    err2 = float(jnp.max(jnp.abs(out2 - ref)))
    assert err2 < 1e-4, f"per-parity/f32 max abs error {err2}"

    # 3) bf16 compute (f32 accumulation), multi-band, fused -- looser tolerance for bf16 inputs.
    out3 = jax.block_until_ready(
        unet_decoder_block(x, weight, bias, band_rows=8, compute_dtype=jnp.bfloat16))
    err3 = float(jnp.max(jnp.abs(out3 - ref)))
    assert err3 < 0.15, f"fused/bf16 max abs error {err3}"

    print("KERNEL_OK")
</pallas_src>

<mosaic_0001>
module attributes {stable_mosaic.version = 11 : i64} {
  func.func @kernel(%arg0: i32, %arg1: i32, %arg2: memref<1x1x18x18x4xf32, #tpu.memory_space<vmem>>, %arg3: memref<32x36xf32, #tpu.memory_space<vmem>>, %arg4: memref<32x1xf32, #tpu.memory_space<vmem>>, %arg5: memref<1x32x256xf32, #tpu.memory_space<vmem>>) attributes {dimension_semantics = [#tpu.dimension_semantics<parallel>, #tpu.dimension_semantics<parallel>], iteration_bounds = array<i64: 2, 1>, scalar_prefetch = 0 : i64, scratch_operands = 0 : i64, tpu.core_type = #tpu.core_type<tc>, window_params = [{transform_indices = @transform_0, window_bounds = array<i64: 1, 1, 18, 18, 4>}, {pipeline_mode = #tpu.pipeline_mode<synchronous>, transform_indices = @transform_1, window_bounds = array<i64: 32, 36>}, {pipeline_mode = #tpu.pipeline_mode<synchronous>, transform_indices = @transform_2, window_bounds = array<i64: 32, 1>}, {transform_indices = @transform_3, window_bounds = array<i64: 1, 32, 256>}]} {
    %c0 = arith.constant 0 : index
    %c0_0 = arith.constant 0 : index
    %c0_1 = arith.constant 0 : index
    %c0_2 = arith.constant 0 : index
    %c0_3 = arith.constant 0 : index
    %0 = vector.load %arg2[%c0, %c0_0, %c0_1, %c0_2, %c0_3] : memref<1x1x18x18x4xf32, #tpu.memory_space<vmem>>, vector<1x1x16x16x4xf32>
    %1 = vector.shape_cast %0 : vector<1x1x16x16x4xf32> to vector<16x16x4xf32>
    %2 = vector.shape_cast %1 : vector<16x16x4xf32> to vector<256x4xf32>
    %c0_4 = arith.constant 0 : index
    %c0_5 = arith.constant 0 : index
    %c0_6 = arith.constant 0 : index
    %c1 = arith.constant 1 : index
    %c0_7 = arith.constant 0 : index
    %3 = vector.load %arg2[%c0_4, %c0_5, %c0_6, %c1, %c0_7] : memref<1x1x18x18x4xf32, #tpu.memory_space<vmem>>, vector<1x1x16x16x4xf32>
    %4 = vector.shape_cast %3 : vector<1x1x16x16x4xf32> to vector<16x16x4xf32>
    %5 = vector.shape_cast %4 : vector<16x16x4xf32> to vector<256x4xf32>
    %c0_8 = arith.constant 0 : index
    %c0_9 = arith.constant 0 : index
    %c0_10 = arith.constant 0 : index
    %c2 = arith.constant 2 : index
    %c0_11 = arith.constant 0 : index
    %6 = vector.load %arg2[%c0_8, %c0_9, %c0_10, %c2, %c0_11] : memref<1x1x18x18x4xf32, #tpu.memory_space<vmem>>, vector<1x1x16x16x4xf32>
    %7 = vector.shape_cast %6 : vector<1x1x16x16x4xf32> to vector<16x16x4xf32>
    %8 = vector.shape_cast %7 : vector<16x16x4xf32> to vector<256x4xf32>
    %c0_12 = arith.constant 0 : index
    %c0_13 = arith.constant 0 : index
    %c1_14 = arith.constant 1 : index
    %c0_15 = arith.constant 0 : index
    %c0_16 = arith.constant 0 : index
    %9 = vector.load %arg2[%c0_12, %c0_13, %c1_14, %c0_15, %c0_16] : memref<1x1x18x18x4xf32, #tpu.memory_space<vmem>>, vector<1x1x16x16x4xf32>
    %10 = vector.shape_cast %9 : vector<1x1x16x16x4xf32> to vector<16x16x4xf32>
    %11 = vector.shape_cast %10 : vector<16x16x4xf32> to vector<256x4xf32>
    %c0_17 = arith.constant 0 : index
    %c0_18 = arith.constant 0 : index
    %c1_19 = arith.constant 1 : index
    %c1_20 = arith.constant 1 : index
    %c0_21 = arith.constant 0 : index
    %12 = vector.load %arg2[%c0_17, %c0_18, %c1_19, %c1_20, %c0_21] : memref<1x1x18x18x4xf32, #tpu.memory_space<vmem>>, vector<1x1x16x16x4xf32>
    %13 = vector.shape_cast %12 : vector<1x1x16x16x4xf32> to vector<16x16x4xf32>
    %14 = vector.shape_cast %13 : vector<16x16x4xf32> to vector<256x4xf32>
    %c0_22 = arith.constant 0 : index
    %c0_23 = arith.constant 0 : index
    %c1_24 = arith.constant 1 : index
    %c2_25 = arith.constant 2 : index
    %c0_26 = arith.constant 0 : index
    %15 = vector.load %arg2[%c0_22, %c0_23, %c1_24, %c2_25, %c0_26] : memref<1x1x18x18x4xf32, #tpu.memory_space<vmem>>, vector<1x1x16x16x4xf32>
    %16 = vector.shape_cast %15 : vector<1x1x16x16x4xf32> to vector<16x16x4xf32>
    %17 = vector.shape_cast %16 : vector<16x16x4xf32> to vector<256x4xf32>
    %c0_27 = arith.constant 0 : index
    %c0_28 = arith.constant 0 : index
    %c2_29 = arith.constant 2 : index
    %c0_30 = arith.constant 0 : index
    %c0_31 = arith.constant 0 : index
    %18 = vector.load %arg2[%c0_27, %c0_28, %c2_29, %c0_30, %c0_31] : memref<1x1x18x18x4xf32, #tpu.memory_space<vmem>>, vector<1x1x16x16x4xf32>
    %19 = vector.shape_cast %18 : vector<1x1x16x16x4xf32> to vector<16x16x4xf32>
    %20 = vector.shape_cast %19 : vector<16x16x4xf32> to vector<256x4xf32>
    %c0_32 = arith.constant 0 : index
    %c0_33 = arith.constant 0 : index
    %c2_34 = arith.constant 2 : index
    %c1_35 = arith.constant 1 : index
    %c0_36 = arith.constant 0 : index
    %21 = vector.load %arg2[%c0_32, %c0_33, %c2_34, %c1_35, %c0_36] : memref<1x1x18x18x4xf32, #tpu.memory_space<vmem>>, vector<1x1x16x16x4xf32>
    %22 = vector.shape_cast %21 : vector<1x1x16x16x4xf32> to vector<16x16x4xf32>
    %23 = vector.shape_cast %22 : vector<16x16x4xf32> to vector<256x4xf32>
    %c0_37 = arith.constant 0 : index
    %c0_38 = arith.constant 0 : index
    %c2_39 = arith.constant 2 : index
    %c2_40 = arith.constant 2 : index
    %c0_41 = arith.constant 0 : index
    %24 = vector.load %arg2[%c0_37, %c0_38, %c2_39, %c2_40, %c0_41] : memref<1x1x18x18x4xf32, #tpu.memory_space<vmem>>, vector<1x1x16x16x4xf32>
    %25 = vector.shape_cast %24 : vector<1x1x16x16x4xf32> to vector<16x16x4xf32>
    %26 = vector.shape_cast %25 : vector<16x16x4xf32> to vector<256x4xf32>
    %27 = tpu.concatenate %2, %5, %8, %11, %14, %17, %20, %23, %26 in 1 : vector<256x4xf32>, vector<256x4xf32>, vector<256x4xf32>, vector<256x4xf32>, vector<256x4xf32>, vector<256x4xf32>, vector<256x4xf32>, vector<256x4xf32>, vector<256x4xf32> -> vector<256x36xf32>
    %c0_42 = arith.constant 0 : index
    %c0_43 = arith.constant 0 : index
    %28 = vector.load %arg3[%c0_42, %c0_43] : memref<32x36xf32, #tpu.memory_space<vmem>>, vector<32x36xf32>
    %cst = arith.constant dense<0.000000e+00> : vector<32x256xf32>
    %29 = tpu.matmul %28, %27, %cst {dimension_numbers = #tpu.dot_dimension_numbers<[1], [1], [0], [0], [0, 0, 1, 0], [], []>} : vector<32x36xf32>, vector<256x36xf32>, vector<32x256xf32> -> vector<32x256xf32>
    %c0_44 = arith.constant 0 : index
    %c0_45 = arith.constant 0 : index
    %30 = vector.load %arg4[%c0_44, %c0_45] : memref<32x1xf32, #tpu.memory_space<vmem>>, vector<32x1xf32>
    %31 = vector.broadcast %30 : vector<32x1xf32> to vector<32x256xf32>
    %32 = arith.addf %29, %31 : vector<32x256xf32>
    %cst_46 = arith.constant 0.000000e+00 : f32
    %33 = vector.broadcast %cst_46 : f32 to vector<32x256xf32>
    %34 = arith.maximumf %32, %33 : vector<32x256xf32>
    %c0_47 = arith.constant 0 : index
    %c0_48 = arith.constant 0 : index
    %c0_49 = arith.constant 0 : index
    %35 = vector.load %arg5[%c0_47, %c0_48, %c0_49] : memref<1x32x256xf32, #tpu.memory_space<vmem>>, vector<1x32x256xf32>
    %36 = vector.shape_cast %35 : vector<1x32x256xf32> to vector<32x256xf32>
    %37 = vector.shape_cast %34 : vector<32x256xf32> to vector<1x32x256xf32>
    tpu.vector_store %arg5[%c0_47, %c0_48, %c0_49], %37 {strides = array<i32>} : memref<1x32x256xf32, #tpu.memory_space<vmem>>, vector<1x32x256xf32>,
    return
  }
  func.func @transform_0(%arg0: i32, %arg1: i32) -> (i32, i32, i32, i32, i32) {
    %c0_i32 = arith.constant 0 : i32
    %c0_i32_0 = arith.constant 0 : i32
    %c0_i32_1 = arith.constant 0 : i32
    %c0_i32_2 = arith.constant 0 : i32
    return %arg0, %arg1, %c0_i32, %c0_i32_0, %c0_i32_1 : i32, i32, i32, i32, i32
  }
  func.func @transform_1(%arg0: i32, %arg1: i32) -> (i32, i32) {
    %c0_i32 = arith.constant 0 : i32
    %c0_i32_0 = arith.constant 0 : i32
    %c0_i32_1 = arith.constant 0 : i32
    return %c0_i32, %c0_i32_0 : i32, i32
  }
  func.func @transform_2(%arg0: i32, %arg1: i32) -> (i32, i32) {
    %c0_i32 = arith.constant 0 : i32
    %c0_i32_0 = arith.constant 0 : i32
    %c0_i32_1 = arith.constant 0 : i32
    return %c0_i32, %c0_i32_0 : i32, i32
  }
  func.func @transform_3(%arg0: i32, %arg1: i32) -> (i32, i32, i32) {
    %c0_i32 = arith.constant 0 : i32
    %c0_i32_0 = arith.constant 0 : i32
    return %arg0, %c0_i32, %arg1 : i32, i32, i32
  }
}

</mosaic_0001>

<llo_original>
// kernel: unet_decoder_block.1
$region0: #{unet_decoder_block.1}
  #allocation0 [shape = 'u32[]', space=smem, size = 0x4, offset = 0x4, fixed_abs, tag = 'smem constant byte address 0x4 - core index']
  #allocation1 [shape = 'u32[72,128]{1,0:T(1,128)}', space=vmem, size = 0x9000, scoped, tag = 'internal scratch']
  %s0 = inlined_call_operand.vmem [shape: f32[2,1,18,18,4], index: 0, kind: input, shape index: {}]
  %s1 = inlined_call_operand.vmem [shape: f32[32,36], index: 1, kind: input, shape index: {}]
  %s2 = inlined_call_operand.vmem [shape: f32[32,1], index: 2, kind: input, shape index: {}]
  %s3 = inlined_call_operand.vmem [shape: f32[2,32,256], index: 3, kind: output, shape index: {}]
  %s4 = sld [smem:[#allocation0]]
  $region45: #{unet_decoder_block.1} parent=0
    _
  %s6 = ssub.s32 1, %s4
  %s7 = scalar_select 0, %s6, %s4
  loop: start=0, step=1, limit=4
  $region2: #{unet_decoder_block.1} parent=0 // loop_pre_header
    _
  $region3: #{unet_decoder_block.1} parent=0 // loop_header
    %s9 = sphi 0, %s13
    %p10 = scmp.ge.s32.totalorder %s9, 4
    %s16 = sphi 0, %s28
    %s17 = sphi 0, %s24
    %s18 = sphi 0, %s16
    %s19 = sphi 0, %s17
    %s20 = sphi 0, %s18
    %s21 = sphi 0, %s19
    %s33 = sphi 0, %s35
    %s36 = sphi 0, %s33
    %s37 = sphi 0, %s36
    %s53 = sphi 0, %s37
    %s57 = sphi 0, %s57
    %s59 = sphi 0, %s57
    %s60 = sphi 0, %s59
    %s74 = sphi 0, %s60
    %s78 = sphi 0, %s78
    %s80 = sphi 0, %s78
    %s81 = sphi 0, %s80
    %s95 = sphi 0, %s81
    %s103 = sphi 0, %s105
    %s106 = sphi 0, %s103
    %s107 = sphi 0, %s106
    %s123 = sphi 0, %s107
  $region4: #{unet_decoder_block.1} parent=0 // loop_header_branch
    %12 = sbr.rel (%p10) target = $region8
  $region5: #{unet_decoder_block.1} parent=0 // loop_body
    %s14 = ssub.s32 %s9, 1
    %s15 = ssub.s32 %s9, 2
    %s22 = sadd.s32 1, %s17
    %p23 = scmp.ge.s32.totalorder %s22, 1
    %s24 = scalar_select %p23, 0, %s22
    %s25 = sadd.s32 1, %s16
    %s26 = scalar_select %p23, %s25, %s16
    %p27 = scmp.ge.s32.totalorder %s26, 2
    %s28 = scalar_select %p27, 0, %s26
    %s29 = ssub.s32 %s16, %s28
    %s30 = ssub.s32 %s17, %s24
    %s31 = sor.u32 %s29, %s30
    %p32 = scmp.eq.s32.totalorder %s31, 0
    %s34 = sadd.s32 %s33, 1
    %s35 = scalar_select %p32, %s33, %s34
    %p38 = pneg %p32
    %p39 = scmp.eq.s32.totalorder %s9, 1
    %p40 = por %p38, %p39
    %p41 = scmp.ne.s32.totalorder %s33, %s36
    %p42 = scmp.eq.s32.totalorder %s9, 0
    %p43 = por %p41, %p42
    %p44 = scmp.ne.s32.totalorder %s33, %s36
    %p45 = scmp.eq.s32.totalorder %s14, 1
    %p46 = por %p44, %p45
    %p47 = scmp.ne.s32.totalorder %s36, %s37
    %p48 = scmp.eq.s32.totalorder %s14, 0
    %p49 = por %p47, %p48
    %p50 = scmp.ne.s32.totalorder %s36, %s37
    %p51 = scmp.eq.s32.totalorder %s15, 1
    %p52 = por %p50, %p51
    %p54 = scmp.ne.s32.totalorder %s37, %s53
    %p55 = scmp.eq.s32.totalorder %s15, 0
    %p56 = por %p54, %p55
    %s58 = sadd.s32 %s57, 1
    %p61 = scmp.eq.s32.totalorder %s9, 1
    %p62 = scmp.ne.s32.totalorder %s57, %s59
    %p63 = scmp.eq.s32.totalorder %s9, 0
    %p64 = por %p62, %p63
    %p65 = scmp.ne.s32.totalorder %s57, %s59
    %p66 = scmp.eq.s32.totalorder %s14, 1
    %p67 = por %p65, %p66
    %p68 = scmp.ne.s32.totalorder %s59, %s60
    %p69 = scmp.eq.s32.totalorder %s14, 0
    %p70 = por %p68, %p69
    %p71 = scmp.ne.s32.totalorder %s59, %s60
    %p72 = scmp.eq.s32.totalorder %s15, 1
    %p73 = por %p71, %p72
    %p75 = scmp.ne.s32.totalorder %s60, %s74
    %p76 = scmp.eq.s32.totalorder %s15, 0
    %p77 = por %p75, %p76
    %s79 = sadd.s32 %s78, 1
    %p82 = scmp.eq.s32.totalorder %s9, 1
    %p83 = scmp.ne.s32.totalorder %s78, %s80
    %p84 = scmp.eq.s32.totalorder %s9, 0
    %p85 = por %p83, %p84
    %p86 = scmp.ne.s32.totalorder %s78, %s80
    %p87 = scmp.eq.s32.totalorder %s14, 1
    %p88 = por %p86, %p87
    %p89 = scmp.ne.s32.totalorder %s80, %s81
    %p90 = scmp.eq.s32.totalorder %s14, 0
    %p91 = por %p89, %p90
    %p92 = scmp.ne.s32.totalorder %s80, %s81
    %p93 = scmp.eq.s32.totalorder %s15, 1
    %p94 = por %p92, %p93
    %p96 = scmp.ne.s32.totalorder %s81, %s95
    %p97 = scmp.eq.s32.totalorder %s15, 0
    %p98 = por %p96, %p97
    %s99 = ssub.s32 %s16, %s28
    %s100 = ssub.s32 %s17, %s24
    %s101 = sor.u32 %s99, %s100
    %p102 = scmp.eq.s32.totalorder %s101, 0
    %s104 = sadd.s32 %s103, 1
    %s105 = scalar_select %p102, %s103, %s104
    %p108 = pneg %p102
    %p109 = scmp.eq.s32.totalorder %s9, 1
    %p110 = por %p108, %p109
    %p111 = scmp.ne.s32.totalorder %s103, %s106
    %p112 = scmp.eq.s32.totalorder %s9, 0
    %p113 = por %p111, %p112
    %p114 = scmp.ne.s32.totalorder %s103, %s106
    %p115 = scmp.eq.s32.totalorder %s14, 1
    %p116 = por %p114, %p115
    %p117 = scmp.ne.s32.totalorder %s106, %s107
    %p118 = scmp.eq.s32.totalorder %s14, 0
    %p119 = por %p117, %p118
    %p120 = scmp.ne.s32.totalorder %s106, %s107
    %p121 = scmp.eq.s32.totalorder %s15, 1
    %p122 = por %p120, %p121
    %p124 = scmp.ne.s32.totalorder %s107, %s123
    %p125 = scmp.eq.s32.totalorder %s15, 0
    %p126 = por %p124, %p125
    %p127 = scmp.le.s32.totalorder 1, %s9
    %p128 = scmp.lt.s32.totalorder %s9, 3
    %p129 = pnand %p127, %p128
    %p130 = pneg %p129
    // Predicated region
    $region9: #{unet_decoder_block.1} parent=5 // pred_check
      _
    $region10: #{unet_decoder_block.1} parent=5 // pred_check_branch
      %132 = sbr.rel (%p129) target = $region12
    $region11: #{unet_decoder_block.1} parent=5 // pred_region
      %s133 = ssub.s32 %s9, 1
      // Predicated region
      $region13: #{unet_decoder_block.1} parent=11 // pred_check
        %p134 = pneg %p70
      $region14: #{unet_decoder_block.1} parent=11 // pred_check_branch
        %136 = sbr.rel (%p134) target = $region16
      $region15: #{unet_decoder_block.1} parent=11 // pred_region
        _
      $region16: #{unet_decoder_block.1} parent=11 // pred_fallthru
        _
      // Predicated region
      $region17: #{unet_decoder_block.1} parent=11 // pred_check
        %p137 = pneg %p91
      $region18: #{unet_decoder_block.1} parent=11 // pred_check_branch
        %139 = sbr.rel (%p137) target = $region20
      $region19: #{unet_decoder_block.1} parent=11 // pred_region
        _
      $region20: #{unet_decoder_block.1} parent=11 // pred_fallthru
        _
    $region12: #{unet_decoder_block.1} parent=5 // pred_fallthru
      _
    %p140 = scmp.lt.s32.totalorder %s9, 2
    // Predicated region
    $region21: #{unet_decoder_block.1} parent=5 // pred_check
      %p141 = pneg %p140
    $region22: #{unet_decoder_block.1} parent=5 // pred_check_branch
      %143 = sbr.rel (%p141) target = $region24
    $region23: #{unet_decoder_block.1} parent=5 // pred_region
      // Predicated region
      $region25: #{unet_decoder_block.1} parent=23 // pred_check
        %p144 = pneg %p43
      $region26: #{unet_decoder_block.1} parent=23 // pred_check_branch
        %146 = sbr.rel (%p144) target = $region28
      $region27: #{unet_decoder_block.1} parent=23 // pred_region
        %p147 = scmp.lt.s32.totalorder %s16, 1
        %s148 = scalar_select %p147, %s16, 1
        %p149 = scmp.lt.s32.totalorder %s17, 0
        %s150 = scalar_select %p149, %s17, 0
        %s151 = smul.addr %s150, 54
        %s152 = smul.addr %s148, 54
        %s153 = sadd.s32 %s151, %s152
        %s154 = smul.addr %s153, 8
        %s155 = scalar_lea.vmem %s0, %s154
      $region28: #{unet_decoder_block.1} parent=23 // pred_fallthru
        _
    $region24: #{unet_decoder_block.1} parent=5 // pred_fallthru
      _
    %p156 = scmp.le.s32.totalorder 1, %s9
    %p157 = scmp.lt.s32.totalorder %s9, 3
    %p158 = pnand %p156, %p157
    %p159 = pneg %p158
    // Predicated region
    $region29: #{unet_decoder_block.1} parent=5 // pred_check
      _
    $region30: #{unet_decoder_block.1} parent=5 // pred_check_branch
      %161 = sbr.rel (%p158) target = $region32
    $region31: #{unet_decoder_block.1} parent=5 // pred_region
      %s162 = ssub.s32 %s9, 1
      %p163 = scmp.lt.s32.totalorder %s18, 1
      %s164 = scalar_select %p163, %s18, 1
      %p165 = scmp.lt.s32.totalorder %s19, 0
      %s166 = scalar_select %p165, %s19, 0
      %s167 = smul.addr %s166, 54
      %s168 = smul.addr %s164, 54
      %s169 = sadd.s32 %s167, %s168
      %s170 = smul.addr %s169, 8
      %s171 = scalar_lea.vmem %s0, %s170
      %p172 = pneg %p49
      %p173 = pneg %p46
      %p174 = pneg %p70
      %p175 = pneg %p67
      %p176 = pneg %p91
      %p177 = pneg %p88
      %p178 = pneg %p119
      %p179 = pneg %p116
      %s180 = smul.u32 2, %s19
      %p181 = scmp.lt.s32.totalorder %s18, 1
      %s182 = scalar_select %p181, %s18, 1
      %p183 = scmp.lt.s32.totalorder %s180, 1
      %s184 = scalar_select %p183, %s180, 1
      %s185 = smul.addr %s182, 8
      %s186 = sadd.s32 %s184, %s185
      %s187 = smul.addr %s186, 8
      %s188 = scalar_lea.vmem %s3, %s187
      %p189 = scmp.lt.s32.totalorder %s18, 1
      %s190 = scalar_select %p189, %s18, 1
      %p191 = scmp.lt.s32.totalorder %s19, 0
      %s192 = scalar_select %p191, %s19, 0
      %s193 = smul.addr %s192, 54
      %s194 = smul.addr %s190, 54
      %s195 = sadd.s32 %s193, %s194
      %s196 = smul.addr %s195, 8
      %s197 = scalar_lea.vmem %s0, %s196
      %s198 = smul.u32 2, %s19
      %p199 = scmp.lt.s32.totalorder %s18, 1
      %s200 = scalar_select %p199, %s18, 1
      %p201 = scmp.lt.s32.totalorder %s198, 1
      %s202 = scalar_select %p201, %s198, 1
      %s203 = smul.addr %s200, 8
      %s204 = sadd.s32 %s202, %s203
      %s205 = smul.addr %s204, 8
      %s206 = scalar_lea.vmem %s3, %s205
      %s207 = smul.u32 2, %s19
      %v208 = vld [vmem:[%s197] sm:$0xff]
      %v209 = vld [vmem:[%s197 + $0x8] sm:$0xff]
      %v210 = vld [vmem:[%s197 + $0x18] sm:$0xff]
      %v211 = vld [vmem:[%s197 + $0x20] sm:$0xff]
      %v212 = vld [vmem:[%s197 + $0x30] sm:$0xff]
      %v213 = vld [vmem:[%s197 + $0x38] sm:$0xff]
      %v214 = vld [vmem:[%s197 + $0x48] sm:$0xff]
      %v215 = vld [vmem:[%s197 + $0x50] sm:$0xff]
      %v216 = vld [vmem:[%s197 + $0x60] sm:$0xff]
      %v217 = vld [vmem:[%s197 + $0x68] sm:$0xff]
      %v218 = vld [vmem:[%s197 + $0x78] sm:$0xff]
      %v219 = vld [vmem:[%s197 + $0x80] sm:$0xff]
      %v220 = vld [vmem:[%s197 + $0x90] sm:$0xff]
      %v221 = vld [vmem:[%s197 + $0x98] sm:$0xff]
      %v222 = vld [vmem:[%s197 + $0xa8] sm:$0xff]
      %v223 = vld [vmem:[%s197 + $0xb0] sm:$0xff]
      %v224 = vld [vmem:[%s197 + $0xc0] sm:$0xff]
      %v225 = vld [vmem:[%s197 + $0xc8] sm:$0xff]
      %v226 = vld [vmem:[%s197 + $0xd8] sm:$0xff]
      %v227 = vld [vmem:[%s197 + $0xe0] sm:$0xff]
      %v228 = vld [vmem:[%s197 + $0xf0] sm:$0xff]
      %v229 = vld [vmem:[%s197 + $0xf8] sm:$0xff]
      %v230 = vld [vmem:[%s197 + $0x108] sm:$0xff]
      %v231 = vld [vmem:[%s197 + $0x110] sm:$0xff]
      %v232 = vld [vmem:[%s197 + $0x120] sm:$0xff]
      %v233 = vld [vmem:[%s197 + $0x128] sm:$0xff]
      %v234 = vld [vmem:[%s197 + $0x138] sm:$0xff]
      %v235 = vld [vmem:[%s197 + $0x140] sm:$0xff]
      %v236 = vld [vmem:[%s197 + $0x150] sm:$0xff]
      %v237 = vld [vmem:[%s197 + $0x158] sm:$0xff]
      %v238 = vld [vmem:[%s197 + $0x168] sm:$0xff]
      %v239 = vld [vmem:[%s197 + $0x170] sm:$0xff]
      %v240 = vld [vmem:[%s197 + $0x1] sm:$0xff]
      %v241 = vld [vmem:[%s197 + $0x9] sm:$0xff]
      %v242 = vld [vmem:[%s197 + $0x19] sm:$0xff]
      %v243 = vld [vmem:[%s197 + $0x21] sm:$0xff]
      %v244 = vld [vmem:[%s197 + $0x31] sm:$0xff]
      %v245 = vld [vmem:[%s197 + $0x39] sm:$0xff]
      %v246 = vld [vmem:[%s197 + $0x49] sm:$0xff]
      %v247 = vld [vmem:[%s197 + $0x51] sm:$0xff]
      %v248 = vld [vmem:[%s197 + $0x61] sm:$0xff]
      %v249 = vld [vmem:[%s197 + $0x69] sm:$0xff]
      %v250 = vld [vmem:[%s197 + $0x79] sm:$0xff]
      %v251 = vld [vmem:[%s197 + $0x81] sm:$0xff]
      %v252 = vld [vmem:[%s197 + $0x91] sm:$0xff]
      %v253 = vld [vmem:[%s197 + $0x99] sm:$0xff]
      %v254 = vld [vmem:[%s197 + $0xa9] sm:$0xff]
      %v255 = vld [vmem:[%s197 + $0xb1] sm:$0xff]
      %v256 = vld [vmem:[%s197 + $0xc1] sm:$0xff]
      %v257 = vld [vmem:[%s197 + $0xc9] sm:$0xff]
      %v258 = vld [vmem:[%s197 + $0xd9] sm:$0xff]
      %v259 = vld [vmem:[%s197 + $0xe1] sm:$0xff]
      %v260 = vld [vmem:[%s197 + $0xf1] sm:$0xff]
      %v261 = vld [vmem:[%s197 + $0xf9] sm:$0xff]
      %v262 = vld [vmem:[%s197 + $0x109] sm:$0xff]
      %v263 = vld [vmem:[%s197 + $0x111] sm:$0xff]
      %v264 = vld [vmem:[%s197 + $0x121] sm:$0xff]
      %v265 = vld [vmem:[%s197 + $0x129] sm:$0xff]
      %v266 = vld [vmem:[%s197 + $0x139] sm:$0xff]
      %v267 = vld [vmem:[%s197 + $0x141] sm:$0xff]
      %v268 = vld [vmem:[%s197 + $0x151] sm:$0xff]
      %v269 = vld [vmem:[%s197 + $0x159] sm:$0xff]
      %v270 = vld [vmem:[%s197 + $0x169] sm:$0xff]
      %v271 = vld [vmem:[%s197 + $0x171] sm:$0xff]
      %v272 = vld [vmem:[%s197 + $0x2] sm:$0xff]
      %v273 = vld [vmem:[%s197 + $0xa] sm:$0xff]
      %v274 = vld [vmem:[%s197 + $0x1a] sm:$0xff]
      %v275 = vld [vmem:[%s197 + $0x22] sm:$0xff]
      %v276 = vld [vmem:[%s197 + $0x32] sm:$0xff]
      %v277 = vld [vmem:[%s197 + $0x3a] sm:$0xff]
      %v278 = vld [vmem:[%s197 + $0x4a] sm:$0xff]
      %v279 = vld [vmem:[%s197 + $0x52] sm:$0xff]
      %v280 = vld [vmem:[%s197 + $0x62] sm:$0xff]
      %v281 = vld [vmem:[%s197 + $0x6a] sm:$0xff]
      %v282 = vld [vmem:[%s197 + $0x7a] sm:$0xff]
      %v283 = vld [vmem:[%s197 + $0x82] sm:$0xff]
      %v284 = vld [vmem:[%s197 + $0x92] sm:$0xff]
      %v285 = vld [vmem:[%s197 + $0x9a] sm:$0xff]
      %v286 = vld [vmem:[%s197 + $0xaa] sm:$0xff]
      %v287 = vld [vmem:[%s197 + $0xb2] sm:$0xff]
      %v288 = vld [vmem:[%s197 + $0xc2] sm:$0xff]
      %v289 = vld [vmem:[%s197 + $0xca] sm:$0xff]
      %v290 = vld [vmem:[%s197 + $0xda] sm:$0xff]
      %v291 = vld [vmem:[%s197 + $0xe2] sm:$0xff]
      %v292 = vld [vmem:[%s197 + $0xf2] sm:$0xff]
      %v293 = vld [vmem:[%s197 + $0xfa] sm:$0xff]
      %v294 = vld [vmem:[%s197 + $0x10a] sm:$0xff]
      %v295 = vld [vmem:[%s197 + $0x112] sm:$0xff]
      %v296 = vld [vmem:[%s197 + $0x122] sm:$0xff]
      %v297 = vld [vmem:[%s197 + $0x12a] sm:$0xff]
      %v298 = vld [vmem:[%s197 + $0x13a] sm:$0xff]
      %v299 = vld [vmem:[%s197 + $0x142] sm:$0xff]
      %v300 = vld [vmem:[%s197 + $0x152] sm:$0xff]
      %v301 = vld [vmem:[%s197 + $0x15a] sm:$0xff]
      %v302 = vld [vmem:[%s197 + $0x16a] sm:$0xff]
      %v303 = vld [vmem:[%s197 + $0x172] sm:$0xff]
      %s304 = scalar_lea.vmem %s197, 24
      %v305 = vld [vmem:[%s304] sm:$0xff]
      %v306 = vld [vmem:[%s304 + $0x8] sm:$0xff]
      %v307 = vld [vmem:[%s304 + $0x18] sm:$0xff]
      %v308 = vld [vmem:[%s304 + $0x20] sm:$0xff]
      %v309 = vld [vmem:[%s304 + $0x30] sm:$0xff]
      %v310 = vld [vmem:[%s304 + $0x38] sm:$0xff]
      %v311 = vld [vmem:[%s304 + $0x48] sm:$0xff]
      %v312 = vld [vmem:[%s304 + $0x50] sm:$0xff]
      %v313 = vld [vmem:[%s304 + $0x60] sm:$0xff]
      %v314 = vld [vmem:[%s304 + $0x68] sm:$0xff]
      %v315 = vld [vmem:[%s304 + $0x78] sm:$0xff]
      %v316 = vld [vmem:[%s304 + $0x80] sm:$0xff]
      %v317 = vld [vmem:[%s304 + $0x90] sm:$0xff]
      %v318 = vld [vmem:[%s304 + $0x98] sm:$0xff]
      %v319 = vld [vmem:[%s304 + $0xa8] sm:$0xff]
      %v320 = vld [vmem:[%s304 + $0xb0] sm:$0xff]
      %v321 = vld [vmem:[%s304 + $0xc0] sm:$0xff]
      %v322 = vld [vmem:[%s304 + $0xc8] sm:$0xff]
      %v323 = vld [vmem:[%s304 + $0xd8] sm:$0xff]
      %v324 = vld [vmem:[%s304 + $0xe0] sm:$0xff]
      %v325 = vld [vmem:[%s304 + $0xf0] sm:$0xff]
      %v326 = vld [vmem:[%s304 + $0xf8] sm:$0xff]
      %v327 = vld [vmem:[%s304 + $0x108] sm:$0xff]
      %v328 = vld [vmem:[%s304 + $0x110] sm:$0xff]
      %v329 = vld [vmem:[%s304 + $0x120] sm:$0xff]
      %v330 = vld [vmem:[%s304 + $0x128] sm:$0xff]
      %v331 = vld [vmem:[%s304 + $0x138] sm:$0xff]
      %v332 = vld [vmem:[%s304 + $0x140] sm:$0xff]
      %v333 = vld [vmem:[%s304 + $0x150] sm:$0xff]
      %v334 = vld [vmem:[%s304 + $0x158] sm:$0xff]
      %v335 = vld [vmem:[%s304 + $0x168] sm:$0xff]
      %v336 = vld [vmem:[%s304 + $0x170] sm:$0xff]
      %v337 = vld [vmem:[%s304 + $0x1] sm:$0xff]
      %v338 = vld [vmem:[%s304 + $0x9] sm:$0xff]
      %v339 = vld [vmem:[%s304 + $0x19] sm:$0xff]
      %v340 = vld [vmem:[%s304 + $0x21] sm:$0xff]
      %v341 = vld [vmem:[%s304 + $0x31] sm:$0xff]
      %v342 = vld [vmem:[%s304 + $0x39] sm:$0xff]
      %v343 = vld [vmem:[%s304 + $0x49] sm:$0xff]
      %v344 = vld [vmem:[%s304 + $0x51] sm:$0xff]
      %v345 = vld [vmem:[%s304 + $0x61] sm:$0xff]
      %v346 = vld [vmem:[%s304 + $0x69] sm:$0xff]
      %v347 = vld [vmem:[%s304 + $0x79] sm:$0xff]
      %v348 = vld [vmem:[%s304 + $0x81] sm:$0xff]
      %v349 = vld [vmem:[%s304 + $0x91] sm:$0xff]
      %v350 = vld [vmem:[%s304 + $0x99] sm:$0xff]
      %v351 = vld [vmem:[%s304 + $0xa9] sm:$0xff]
      %v352 = vld [vmem:[%s304 + $0xb1] sm:$0xff]
      %v353 = vld [vmem:[%s304 + $0xc1] sm:$0xff]
      %v354 = vld [vmem:[%s304 + $0xc9] sm:$0xff]
      %v355 = vld [vmem:[%s304 + $0xd9] sm:$0xff]
      %v356 = vld [vmem:[%s304 + $0xe1] sm:$0xff]
      %v357 = vld [vmem:[%s304 + $0xf1] sm:$0xff]
      %v358 = vld [vmem:[%s304 + $0xf9] sm:$0xff]
      %v359 = vld [vmem:[%s304 + $0x109] sm:$0xff]
      %v360 = vld [vmem:[%s304 + $0x111] sm:$0xff]
      %v361 = vld [vmem:[%s304 + $0x121] sm:$0xff]
      %v362 = vld [vmem:[%s304 + $0x129] sm:$0xff]
      %v363 = vld [vmem:[%s304 + $0x139] sm:$0xff]
      %v364 = vld [vmem:[%s304 + $0x141] sm:$0xff]
      %v365 = vld [vmem:[%s304 + $0x151] sm:$0xff]
      %v366 = vld [vmem:[%s304 + $0x159] sm:$0xff]
      %v367 = vld [vmem:[%s304 + $0x169] sm:$0xff]
      %v368 = vld [vmem:[%s304 + $0x171] sm:$0xff]
      %v369 = vld [vmem:[%s304 + $0x2] sm:$0xff]
      %v370 = vld [vmem:[%s304 + $0xa] sm:$0xff]
      %v371 = vld [vmem:[%s304 + $0x1a] sm:$0xff]
      %v372 = vld [vmem:[%s304 + $0x22] sm:$0xff]
      %v373 = vld [vmem:[%s304 + $0x32] sm:$0xff]
      %v374 = vld [vmem:[%s304 + $0x3a] sm:$0xff]
      %v375 = vld [vmem:[%s304 + $0x4a] sm:$0xff]
      %v376 = vld [vmem:[%s304 + $0x52] sm:$0xff]
      %v377 = vld [vmem:[%s304 + $0x62] sm:$0xff]
      %v378 = vld [vmem:[%s304 + $0x6a] sm:$0xff]
      %v379 = vld [vmem:[%s304 + $0x7a] sm:$0xff]
      %v380 = vld [vmem:[%s304 + $0x82] sm:$0xff]
      %v381 = vld [vmem:[%s304 + $0x92] sm:$0xff]
      %v382 = vld [vmem:[%s304 + $0x9a] sm:$0xff]
      %v383 = vld [vmem:[%s304 + $0xaa] sm:$0xff]
      %v384 = vld [vmem:[%s304 + $0xb2] sm:$0xff]
      %v385 = vld [vmem:[%s304 + $0xc2] sm:$0xff]
      %v386 = vld [vmem:[%s304 + $0xca] sm:$0xff]
      %v387 = vld [vmem:[%s304 + $0xda] sm:$0xff]
      %v388 = vld [vmem:[%s304 + $0xe2] sm:$0xff]
      %v389 = vld [vmem:[%s304 + $0xf2] sm:$0xff]
      %v390 = vld [vmem:[%s304 + $0xfa] sm:$0xff]
      %v391 = vld [vmem:[%s304 + $0x10a] sm:$0xff]
      %v392 = vld [vmem:[%s304 + $0x112] sm:$0xff]
      %v393 = vld [vmem:[%s304 + $0x122] sm:$0xff]
      %v394 = vld [vmem:[%s304 + $0x12a] sm:$0xff]
      %v395 = vld [vmem:[%s304 + $0x13a] sm:$0xff]
      %v396 = vld [vmem:[%s304 + $0x142] sm:$0xff]
      %v397 = vld [vmem:[%s304 + $0x152] sm:$0xff]
      %v398 = vld [vmem:[%s304 + $0x15a] sm:$0xff]
      %v399 = vld [vmem:[%s304 + $0x16a] sm:$0xff]
      %v400 = vld [vmem:[%s304 + $0x172] sm:$0xff]
      %s401 = scalar_lea.vmem %s197, 48
      %v402 = vld [vmem:[%s401] sm:$0xff]
      %v403 = vld [vmem:[%s401 + $0x8] sm:$0xff]
      %v404 = vld [vmem:[%s401 + $0x18] sm:$0xff]
      %v405 = vld [vmem:[%s401 + $0x20] sm:$0xff]
      %v406 = vld [vmem:[%s401 + $0x30] sm:$0xff]
      %v407 = vld [vmem:[%s401 + $0x38] sm:$0xff]
      %v408 = vld [vmem:[%s401 + $0x48] sm:$0xff]
      %v409 = vld [vmem:[%s401 + $0x50] sm:$0xff]
      %v410 = vld [vmem:[%s401 + $0x60] sm:$0xff]
      %v411 = vld [vmem:[%s401 + $0x68] sm:$0xff]
      %v412 = vld [vmem:[%s401 + $0x78] sm:$0xff]
      %v413 = vld [vmem:[%s401 + $0x80] sm:$0xff]
      %v414 = vld [vmem:[%s401 + $0x90] sm:$0xff]
      %v415 = vld [vmem:[%s401 + $0x98] sm:$0xff]
      %v416 = vld [vmem:[%s401 + $0xa8] sm:$0xff]
      %v417 = vld [vmem:[%s401 + $0xb0] sm:$0xff]
      %v418 = vld [vmem:[%s401 + $0xc0] sm:$0xff]
      %v419 = vld [vmem:[%s401 + $0xc8] sm:$0xff]
      %v420 = vld [vmem:[%s401 + $0xd8] sm:$0xff]
      %v421 = vld [vmem:[%s401 + $0xe0] sm:$0xff]
      %v422 = vld [vmem:[%s401 + $0xf0] sm:$0xff]
      %v423 = vld [vmem:[%s401 + $0xf8] sm:$0xff]
      %v424 = vld [vmem:[%s401 + $0x108] sm:$0xff]
      %v425 = vld [vmem:[%s401 + $0x110] sm:$0xff]
      %v426 = vld [vmem:[%s401 + $0x120] sm:$0xff]
      %v427 = vld [vmem:[%s401 + $0x128] sm:$0xff]
      %v428 = vld [vmem:[%s401 + $0x138] sm:$0xff]
      %v429 = vld [vmem:[%s401 + $0x140] sm:$0xff]
      %v430 = vld [vmem:[%s401 + $0x150] sm:$0xff]
      %v431 = vld [vmem:[%s401 + $0x158] sm:$0xff]
      %v432 = vld [vmem:[%s401 + $0x168] sm:$0xff]
      %v433 = vld [vmem:[%s401 + $0x170] sm:$0xff]
      %v434 = vld [vmem:[%s401 + $0x1] sm:$0xff]
      %v435 = vld [vmem:[%s401 + $0x9] sm:$0xff]
      %v436 = vld [vmem:[%s401 + $0x19] sm:$0xff]
      %v437 = vld [vmem:[%s401 + $0x21] sm:$0xff]
      %v438 = vld [vmem:[%s401 + $0x31] sm:$0xff]
      %v439 = vld [vmem:[%s401 + $0x39] sm:$0xff]
      %v440 = vld [vmem:[%s401 + $0x49] sm:$0xff]
      %v441 = vld [vmem:[%s401 + $0x51] sm:$0xff]
      %v442 = vld [vmem:[%s401 + $0x61] sm:$0xff]
      %v443 = vld [vmem:[%s401 + $0x69] sm:$0xff]
      %v444 = vld [vmem:[%s401 + $0x79] sm:$0xff]
      %v445 = vld [vmem:[%s401 + $0x81] sm:$0xff]
      %v446 = vld [vmem:[%s401 + $0x91] sm:$0xff]
      %v447 = vld [vmem:[%s401 + $0x99] sm:$0xff]
      %v448 = vld [vmem:[%s401 + $0xa9] sm:$0xff]
      %v449 = vld [vmem:[%s401 + $0xb1] sm:$0xff]
      %v450 = vld [vmem:[%s401 + $0xc1] sm:$0xff]
      %v451 = vld [vmem:[%s401 + $0xc9] sm:$0xff]
      %v452 = vld [vmem:[%s401 + $0xd9] sm:$0xff]
      %v453 = vld [vmem:[%s401 + $0xe1] sm:$0xff]
      %v454 = vld [vmem:[%s401 + $0xf1] sm:$0xff]
      %v455 = vld [vmem:[%s401 + $0xf9] sm:$0xff]
      %v456 = vld [vmem:[%s401 + $0x109] sm:$0xff]
      %v457 = vld [vmem:[%s401 + $0x111] sm:$0xff]
      %v458 = vld [vmem:[%s401 + $0x121] sm:$0xff]
      %v459 = vld [vmem:[%s401 + $0x129] sm:$0xff]
      %v460 = vld [vmem:[%s401 + $0x139] sm:$0xff]
      %v461 = vld [vmem:[%s401 + $0x141] sm:$0xff]
      %v462 = vld [vmem:[%s401 + $0x151] sm:$0xff]
      %v463 = vld [vmem:[%s401 + $0x159] sm:$0xff]
      %v464 = vld [vmem:[%s401 + $0x169] sm:$0xff]
      %v465 = vld [vmem:[%s401 + $0x171] sm:$0xff]
      %v466 = vld [vmem:[%s401 + $0x2] sm:$0xff]
      %v467 = vld [vmem:[%s401 + $0xa] sm:$0xff]
      %v468 = vld [vmem:[%s401 + $0x1a] sm:$0xff]
      %v469 = vld [vmem:[%s401 + $0x22] sm:$0xff]
      %v470 = vld [vmem:[%s401 + $0x32] sm:$0xff]
      %v471 = vld [vmem:[%s401 + $0x3a] sm:$0xff]
      %v472 = vld [vmem:[%s401 + $0x4a] sm:$0xff]
      %v473 = vld [vmem:[%s401 + $0x52] sm:$0xff]
      %v474 = vld [vmem:[%s401 + $0x62] sm:$0xff]
      %v475 = vld [vmem:[%s401 + $0x6a] sm:$0xff]
      %v476 = vld [vmem:[%s401 + $0x7a] sm:$0xff]
      %v477 = vld [vmem:[%s401 + $0x82] sm:$0xff]
      %v478 = vld [vmem:[%s401 + $0x92] sm:$0xff]
      %v479 = vld [vmem:[%s401 + $0x9a] sm:$0xff]
      %v480 = vld [vmem:[%s401 + $0xaa] sm:$0xff]
      %v481 = vld [vmem:[%s401 + $0xb2] sm:$0xff]
      %v482 = vld [vmem:[%s401 + $0xc2] sm:$0xff]
      %v483 = vld [vmem:[%s401 + $0xca] sm:$0xff]
      %v484 = vld [vmem:[%s401 + $0xda] sm:$0xff]
      %v485 = vld [vmem:[%s401 + $0xe2] sm:$0xff]
      %v486 = vld [vmem:[%s401 + $0xf2] sm:$0xff]
      %v487 = vld [vmem:[%s401 + $0xfa] sm:$0xff]
      %v488 = vld [vmem:[%s401 + $0x10a] sm:$0xff]
      %v489 = vld [vmem:[%s401 + $0x112] sm:$0xff]
      %v490 = vld [vmem:[%s401 + $0x122] sm:$0xff]
      %v491 = vld [vmem:[%s401 + $0x12a] sm:$0xff]
      %v492 = vld [vmem:[%s401 + $0x13a] sm:$0xff]
      %v493 = vld [vmem:[%s401 + $0x142] sm:$0xff]
      %v494 = vld [vmem:[%s401 + $0x152] sm:$0xff]
      %v495 = vld [vmem:[%s401 + $0x15a] sm:$0xff]
      %v496 = vld [vmem:[%s401 + $0x16a] sm:$0xff]
      %v497 = vld [vmem:[%s401 + $0x172] sm:$0xff]
      %530 = vrot.lane.b32.xlu0 %v240, 4
      %v531 = vpop.permute.xlu0 %530
      %532 = vrot.lane.b32.xlu0 %v241, 4
      %v533 = vpop.permute.xlu0 %532
      %534 = vrot.lane.b32.xlu0 %v242, 4
      %v535 = vpop.permute.xlu0 %534
      %536 = vrot.lane.b32.xlu0 %v243, 4
      %v537 = vpop.permute.xlu0 %536
      %538 = vrot.lane.b32.xlu0 %v244, 4
      %v539 = vpop.permute.xlu0 %538
      %540 = vrot.lane.b32.xlu0 %v245, 4
      %v541 = vpop.permute.xlu0 %540
      %542 = vrot.lane.b32.xlu0 %v246, 4
      %v543 = vpop.permute.xlu0 %542
      %544 = vrot.lane.b32.xlu0 %v247, 4
      %v545 = vpop.permute.xlu0 %544
      %546 = vrot.lane.b32.xlu0 %v248, 4
      %v547 = vpop.permute.xlu0 %546
      %548 = vrot.lane.b32.xlu0 %v249, 4
      %v549 = vpop.permute.xlu0 %548
      %550 = vrot.lane.b32.xlu0 %v250, 4
      %v551 = vpop.permute.xlu0 %550
      %552 = vrot.lane.b32.xlu0 %v251, 4
      %v553 = vpop.permute.xlu0 %552
      %554 = vrot.lane.b32.xlu0 %v252, 4
      %v555 = vpop.permute.xlu0 %554
      %556 = vrot.lane.b32.xlu0 %v253, 4
      %v557 = vpop.permute.xlu0 %556
      %558 = vrot.lane.b32.xlu0 %v254, 4
      %v559 = vpop.permute.xlu0 %558
      %560 = vrot.lane.b32.xlu0 %v255, 4
      %v561 = vpop.permute.xlu0 %560
      %562 = vrot.lane.b32.xlu0 %v256, 4
      %v563 = vpop.permute.xlu0 %562
      %564 = vrot.lane.b32.xlu0 %v257, 4
      %v565 = vpop.permute.xlu0 %564
      %566 = vrot.lane.b32.xlu0 %v258, 4
      %v567 = vpop.permute.xlu0 %566
      %568 = vrot.lane.b32.xlu0 %v259, 4
      %v569 = vpop.permute.xlu0 %568
      %570 = vrot.lane.b32.xlu0 %v260, 4
      %v571 = vpop.permute.xlu0 %570
      %572 = vrot.lane.b32.xlu0 %v261, 4
      %v573 = vpop.permute.xlu0 %572
      %574 = vrot.lane.b32.xlu0 %v262, 4
      %v575 = vpop.permute.xlu0 %574
      %576 = vrot.lane.b32.xlu0 %v263, 4
      %v577 = vpop.permute.xlu0 %576
      %578 = vrot.lane.b32.xlu0 %v264, 4
      %v579 = vpop.permute.xlu0 %578
      %580 = vrot.lane.b32.xlu0 %v265, 4
      %v581 = vpop.permute.xlu0 %580
      %582 = vrot.lane.b32.xlu0 %v266, 4
      %v583 = vpop.permute.xlu0 %582
      %584 = vrot.lane.b32.xlu0 %v267, 4
      %v585 = vpop.permute.xlu0 %584
      %586 = vrot.lane.b32.xlu0 %v268, 4
      %v587 = vpop.permute.xlu0 %586
      %588 = vrot.lane.b32.xlu0 %v269, 4
      %v589 = vpop.permute.xlu0 %588
      %590 = vrot.lane.b32.xlu0 %v270, 4
      %v591 = vpop.permute.xlu0 %590
      %592 = vrot.lane.b32.xlu0 %v271, 4
      %v593 = vpop.permute.xlu0 %592
      %658 = vrot.lane.b32.xlu0 %v272, 8
      %v659 = vpop.permute.xlu0 %658
      %660 = vrot.lane.b32.xlu0 %v273, 8
      %v661 = vpop.permute.xlu0 %660
      %662 = vrot.lane.b32.xlu0 %v274, 8
      %v663 = vpop.permute.xlu0 %662
      %664 = vrot.lane.b32.xlu0 %v275, 8
      %v665 = vpop.permute.xlu0 %664
      %666 = vrot.lane.b32.xlu0 %v276, 8
      %v667 = vpop.permute.xlu0 %666
      %668 = vrot.lane.b32.xlu0 %v277, 8
      %v669 = vpop.permute.xlu0 %668
      %670 = vrot.lane.b32.xlu0 %v278, 8
      %v671 = vpop.permute.xlu0 %670
      %672 = vrot.lane.b32.xlu0 %v279, 8
      %v673 = vpop.permute.xlu0 %672
      %674 = vrot.lane.b32.xlu0 %v280, 8
      %v675 = vpop.permute.xlu0 %674
      %676 = vrot.lane.b32.xlu0 %v281, 8
      %v677 = vpop.permute.xlu0 %676
      %678 = vrot.lane.b32.xlu0 %v282, 8
      %v679 = vpop.permute.xlu0 %678
      %680 = vrot.lane.b32.xlu0 %v283, 8
      %v681 = vpop.permute.xlu0 %680
      %682 = vrot.lane.b32.xlu0 %v284, 8
      %v683 = vpop.permute.xlu0 %682
      %684 = vrot.lane.b32.xlu0 %v285, 8
      %v685 = vpop.permute.xlu0 %684
      %686 = vrot.lane.b32.xlu0 %v286, 8
      %v687 = vpop.permute.xlu0 %686
      %688 = vrot.lane.b32.xlu0 %v287, 8
      %v689 = vpop.permute.xlu0 %688
      %690 = vrot.lane.b32.xlu0 %v288, 8
      %v691 = vpop.permute.xlu0 %690
      %692 = vrot.lane.b32.xlu0 %v289, 8
      %v693 = vpop.permute.xlu0 %692
      %694 = vrot.lane.b32.xlu0 %v290, 8
      %v695 = vpop.permute.xlu0 %694
      %696 = vrot.lane.b32.xlu0 %v291, 8
      %v697 = vpop.permute.xlu0 %696
      %698 = vrot.lane.b32.xlu0 %v292, 8
      %v699 = vpop.permute.xlu0 %698
      %700 = vrot.lane.b32.xlu0 %v293, 8
      %v701 = vpop.permute.xlu0 %700
      %702 = vrot.lane.b32.xlu0 %v294, 8
      %v703 = vpop.permute.xlu0 %702
      %704 = vrot.lane.b32.xlu0 %v295, 8
      %v705 = vpop.permute.xlu0 %704
      %706 = vrot.lane.b32.xlu0 %v296, 8
      %v707 = vpop.permute.xlu0 %706
      %708 = vrot.lane.b32.xlu0 %v297, 8
      %v709 = vpop.permute.xlu0 %708
      %710 = vrot.lane.b32.xlu0 %v298, 8
      %v711 = vpop.permute.xlu0 %710
      %712 = vrot.lane.b32.xlu0 %v299, 8
      %v713 = vpop.permute.xlu0 %712
      %714 = vrot.lane.b32.xlu0 %v300, 8
      %v715 = vpop.permute.xlu0 %714
      %716 = vrot.lane.b32.xlu0 %v301, 8
      %v717 = vpop.permute.xlu0 %716
      %718 = vrot.lane.b32.xlu0 %v302, 8
      %v719 = vpop.permute.xlu0 %718
      %720 = vrot.lane.b32.xlu0 %v303, 8
      %v721 = vpop.permute.xlu0 %720
      %786 = vrot.lane.b32.xlu0 %v305, 12
      %v787 = vpop.permute.xlu0 %786
      %788 = vrot.lane.b32.xlu0 %v306, 12
      %v789 = vpop.permute.xlu0 %788
      %790 = vrot.lane.b32.xlu0 %v307, 12
      %v791 = vpop.permute.xlu0 %790
      %792 = vrot.lane.b32.xlu0 %v308, 12
      %v793 = vpop.permute.xlu0 %792
      %794 = vrot.lane.b32.xlu0 %v309, 12
      %v795 = vpop.permute.xlu0 %794
      %796 = vrot.lane.b32.xlu0 %v310, 12
      %v797 = vpop.permute.xlu0 %796
      %798 = vrot.lane.b32.xlu0 %v311, 12
      %v799 = vpop.permute.xlu0 %798
      %800 = vrot.lane.b32.xlu0 %v312, 12
      %v801 = vpop.permute.xlu0 %800
      %802 = vrot.lane.b32.xlu0 %v313, 12
      %v803 = vpop.permute.xlu0 %802
      %804 = vrot.lane.b32.xlu0 %v314, 12
      %v805 = vpop.permute.xlu0 %804
      %806 = vrot.lane.b32.xlu0 %v315, 12
      %v807 = vpop.permute.xlu0 %806
      %808 = vrot.lane.b32.xlu0 %v316, 12
      %v809 = vpop.permute.xlu0 %808
      %810 = vrot.lane.b32.xlu0 %v317, 12
      %v811 = vpop.permute.xlu0 %810
      %812 = vrot.lane.b32.xlu0 %v318, 12
      %v813 = vpop.permute.xlu0 %812
      %814 = vrot.lane.b32.xlu0 %v319, 12
      %v815 = vpop.permute.xlu0 %814
      %816 = vrot.lane.b32.xlu0 %v320, 12
      %v817 = vpop.permute.xlu0 %816
      %818 = vrot.lane.b32.xlu0 %v321, 12
      %v819 = vpop.permute.xlu0 %818
      %820 = vrot.lane.b32.xlu0 %v322, 12
      %v821 = vpop.permute.xlu0 %820
      %822 = vrot.lane.b32.xlu0 %v323, 12
      %v823 = vpop.permute.xlu0 %822
      %824 = vrot.lane.b32.xlu0 %v324, 12
      %v825 = vpop.permute.xlu0 %824
      %826 = vrot.lane.b32.xlu0 %v325, 12
      %v827 = vpop.permute.xlu0 %826
      %828 = vrot.lane.b32.xlu0 %v326, 12
      %v829 = vpop.permute.xlu0 %828
      %830 = vrot.lane.b32.xlu0 %v327, 12
      %v831 = vpop.permute.xlu0 %830
      %832 = vrot.lane.b32.xlu0 %v328, 12
      %v833 = vpop.permute.xlu0 %832
      %834 = vrot.lane.b32.xlu0 %v329, 12
      %v835 = vpop.permute.xlu0 %834
      %836 = vrot.lane.b32.xlu0 %v330, 12
      %v837 = vpop.permute.xlu0 %836
      %838 = vrot.lane.b32.xlu0 %v331, 12
      %v839 = vpop.permute.xlu0 %838
      %840 = vrot.lane.b32.xlu0 %v332, 12
      %v841 = vpop.permute.xlu0 %840
      %842 = vrot.lane.b32.xlu0 %v333, 12
      %v843 = vpop.permute.xlu0 %842
      %844 = vrot.lane.b32.xlu0 %v334, 12
      %v845 = vpop.permute.xlu0 %844
      %846 = vrot.lane.b32.xlu0 %v335, 12
      %v847 = vpop.permute.xlu0 %846
      %848 = vrot.lane.b32.xlu0 %v336, 12
      %v849 = vpop.permute.xlu0 %848
      %914 = vrot.lane.b32.xlu0 %v337, 16
      %v915 = vpop.permute.xlu0 %914
      %916 = vrot.lane.b32.xlu0 %v338, 16
      %v917 = vpop.permute.xlu0 %916
      %918 = vrot.lane.b32.xlu0 %v339, 16
      %v919 = vpop.permute.xlu0 %918
      %920 = vrot.lane.b32.xlu0 %v340, 16
      %v921 = vpop.permute.xlu0 %920
      %922 = vrot.lane.b32.xlu0 %v341, 16
      %v923 = vpop.permute.xlu0 %922
      %924 = vrot.lane.b32.xlu0 %v342, 16
      %v925 = vpop.permute.xlu0 %924
      %926 = vrot.lane.b32.xlu0 %v343, 16
      %v927 = vpop.permute.xlu0 %926
      %928 = vrot.lane.b32.xlu0 %v344, 16
      %v929 = vpop.permute.xlu0 %928
      %930 = vrot.lane.b32.xlu0 %v345, 16
      %v931 = vpop.permute.xlu0 %930
      %932 = vrot.lane.b32.xlu0 %v346, 16
      %v933 = vpop.permute.xlu0 %932
      %934 = vrot.lane.b32.xlu0 %v347, 16
      %v935 = vpop.permute.xlu0 %934
      %936 = vrot.lane.b32.xlu0 %v348, 16
      %v937 = vpop.permute.xlu0 %936
      %938 = vrot.lane.b32.xlu0 %v349, 16
      %v939 = vpop.permute.xlu0 %938
      %940 = vrot.lane.b32.xlu0 %v350, 16
      %v941 = vpop.permute.xlu0 %940
      %942 = vrot.lane.b32.xlu0 %v351, 16
      %v943 = vpop.permute.xlu0 %942
      %944 = vrot.lane.b32.xlu0 %v352, 16
      %v945 = vpop.permute.xlu0 %944
      %946 = vrot.lane.b32.xlu0 %v353, 16
      %v947 = vpop.permute.xlu0 %946
      %948 = vrot.lane.b32.xlu0 %v354, 16
      %v949 = vpop.permute.xlu0 %948
      %950 = vrot.lane.b32.xlu0 %v355, 16
      %v951 = vpop.permute.xlu0 %950
      %952 = vrot.lane.b32.xlu0 %v356, 16
      %v953 = vpop.permute.xlu0 %952
      %954 = vrot.lane.b32.xlu0 %v357, 16
      %v955 = vpop.permute.xlu0 %954
      %956 = vrot.lane.b32.xlu0 %v358, 16
      %v957 = vpop.permute.xlu0 %956
      %958 = vrot.lane.b32.xlu0 %v359, 16
      %v959 = vpop.permute.xlu0 %958
      %960 = vrot.lane.b32.xlu0 %v360, 16
      %v961 = vpop.permute.xlu0 %960
      %962 = vrot.lane.b32.xlu0 %v361, 16
      %v963 = vpop.permute.xlu0 %962
      %964 = vrot.lane.b32.xlu0 %v362, 16
      %v965 = vpop.permute.xlu0 %964
      %966 = vrot.lane.b32.xlu0 %v363, 16
      %v967 = vpop.permute.xlu0 %966
      %968 = vrot.lane.b32.xlu0 %v364, 16
      %v969 = vpop.permute.xlu0 %968
      %970 = vrot.lane.b32.xlu0 %v365, 16
      %v971 = vpop.permute.xlu0 %970
      %972 = vrot.lane.b32.xlu0 %v366, 16
      %v973 = vpop.permute.xlu0 %972
      %974 = vrot.lane.b32.xlu0 %v367, 16
      %v975 = vpop.permute.xlu0 %974
      %976 = vrot.lane.b32.xlu0 %v368, 16
      %v977 = vpop.permute.xlu0 %976
      %1042 = vrot.lane.b32.xlu0 %v369, 20
      %v1043 = vpop.permute.xlu0 %1042
      %1044 = vrot.lane.b32.xlu0 %v370, 20
      %v1045 = vpop.permute.xlu0 %1044
      %1046 = vrot.lane.b32.xlu0 %v371, 20
      %v1047 = vpop.permute.xlu0 %1046
      %1048 = vrot.lane.b32.xlu0 %v372, 20
      %v1049 = vpop.permute.xlu0 %1048
      %1050 = vrot.lane.b32.xlu0 %v373, 20
      %v1051 = vpop.permute.xlu0 %1050
      %1052 = vrot.lane.b32.xlu0 %v374, 20
      %v1053 = vpop.permute.xlu0 %1052
      %1054 = vrot.lane.b32.xlu0 %v375, 20
      %v1055 = vpop.permute.xlu0 %1054
      %1056 = vrot.lane.b32.xlu0 %v376, 20
      %v1057 = vpop.permute.xlu0 %1056
      %1058 = vrot.lane.b32.xlu0 %v377, 20
      %v1059 = vpop.permute.xlu0 %1058
      %1060 = vrot.lane.b32.xlu0 %v378, 20
      %v1061 = vpop.permute.xlu0 %1060
      %1062 = vrot.lane.b32.xlu0 %v379, 20
      %v1063 = vpop.permute.xlu0 %1062
      %1064 = vrot.lane.b32.xlu0 %v380, 20
      %v1065 = vpop.permute.xlu0 %1064
      %1066 = vrot.lane.b32.xlu0 %v381, 20
      %v1067 = vpop.permute.xlu0 %1066
      %1068 = vrot.lane.b32.xlu0 %v382, 20
      %v1069 = vpop.permute.xlu0 %1068
      %1070 = vrot.lane.b32.xlu0 %v383, 20
      %v1071 = vpop.permute.xlu0 %1070
      %1072 = vrot.lane.b32.xlu0 %v384, 20
      %v1073 = vpop.permute.xlu0 %1072
      %1074 = vrot.lane.b32.xlu0 %v385, 20
      %v1075 = vpop.permute.xlu0 %1074
      %1076 = vrot.lane.b32.xlu0 %v386, 20
      %v1077 = vpop.permute.xlu0 %1076
      %1078 = vrot.lane.b32.xlu0 %v387, 20
      %v1079 = vpop.permute.xlu0 %1078
      %1080 = vrot.lane.b32.xlu0 %v388, 20
      %v1081 = vpop.permute.xlu0 %1080
      %1082 = vrot.lane.b32.xlu0 %v389, 20
      %v1083 = vpop.permute.xlu0 %1082
      %1084 = vrot.lane.b32.xlu0 %v390, 20
      %v1085 = vpop.permute.xlu0 %1084
      %1086 = vrot.lane.b32.xlu0 %v391, 20
      %v1087 = vpop.permute.xlu0 %1086
      %1088 = vrot.lane.b32.xlu0 %v392, 20
      %v1089 = vpop.permute.xlu0 %1088
      %1090 = vrot.lane.b32.xlu0 %v393, 20
      %v1091 = vpop.permute.xlu0 %1090
      %1092 = vrot.lane.b32.xlu0 %v394, 20
      %v1093 = vpop.permute.xlu0 %1092
      %1094 = vrot.lane.b32.xlu0 %v395, 20
      %v1095 = vpop.permute.xlu0 %1094
      %1096 = vrot.lane.b32.xlu0 %v396, 20
      %v1097 = vpop.permute.xlu0 %1096
      %1098 = vrot.lane.b32.xlu0 %v397, 20
      %v1099 = vpop.permute.xlu0 %1098
      %1100 = vrot.lane.b32.xlu0 %v398, 20
      %v1101 = vpop.permute.xlu0 %1100
      %1102 = vrot.lane.b32.xlu0 %v399, 20
      %v1103 = vpop.permute.xlu0 %1102
      %1104 = vrot.lane.b32.xlu0 %v400, 20
      %v1105 = vpop.permute.xlu0 %1104
      %1170 = vrot.lane.b32.xlu0 %v402, 24
      %v1171 = vpop.permute.xlu0 %1170
      %1172 = vrot.lane.b32.xlu0 %v403, 24
      %v1173 = vpop.permute.xlu0 %1172
      %1174 = vrot.lane.b32.xlu0 %v404, 24
      %v1175 = vpop.permute.xlu0 %1174
      %1176 = vrot.lane.b32.xlu0 %v405, 24
      %v1177 = vpop.permute.xlu0 %1176
      %1178 = vrot.lane.b32.xlu0 %v406, 24
      %v1179 = vpop.permute.xlu0 %1178
      %1180 = vrot.lane.b32.xlu0 %v407, 24
      %v1181 = vpop.permute.xlu0 %1180
      %1182 = vrot.lane.b32.xlu0 %v408, 24
      %v1183 = vpop.permute.xlu0 %1182
      %1184 = vrot.lane.b32.xlu0 %v409, 24
      %v1185 = vpop.permute.xlu0 %1184
      %1186 = vrot.lane.b32.xlu0 %v410, 24
      %v1187 = vpop.permute.xlu0 %1186
      %1188 = vrot.lane.b32.xlu0 %v411, 24
      %v1189 = vpop.permute.xlu0 %1188
      %1190 = vrot.lane.b32.xlu0 %v412, 24
      %v1191 = vpop.permute.xlu0 %1190
      %1192 = vrot.lane.b32.xlu0 %v413, 24
      %v1193 = vpop.permute.xlu0 %1192
      %1194 = vrot.lane.b32.xlu0 %v414, 24
      %v1195 = vpop.permute.xlu0 %1194
      %1196 = vrot.lane.b32.xlu0 %v415, 24
      %v1197 = vpop.permute.xlu0 %1196
      %1198 = vrot.lane.b32.xlu0 %v416, 24
      %v1199 = vpop.permute.xlu0 %1198
      %1200 = vrot.lane.b32.xlu0 %v417, 24
      %v1201 = vpop.permute.xlu0 %1200
      %1202 = vrot.lane.b32.xlu0 %v418, 24
      %v1203 = vpop.permute.xlu0 %1202
      %1204 = vrot.lane.b32.xlu0 %v419, 24
      %v1205 = vpop.permute.xlu0 %1204
      %1206 = vrot.lane.b32.xlu0 %v420, 24
      %v1207 = vpop.permute.xlu0 %1206
      %1208 = vrot.lane.b32.xlu0 %v421, 24
      %v1209 = vpop.permute.xlu0 %1208
      %1210 = vrot.lane.b32.xlu0 %v422, 24
      %v1211 = vpop.permute.xlu0 %1210
      %1212 = vrot.lane.b32.xlu0 %v423, 24
      %v1213 = vpop.permute.xlu0 %1212
      %1214 = vrot.lane.b32.xlu0 %v424, 24
      %v1215 = vpop.permute.xlu0 %1214
      %1216 = vrot.lane.b32.xlu0 %v425, 24
      %v1217 = vpop.permute.xlu0 %1216
      %1218 = vrot.lane.b32.xlu0 %v426, 24
      %v1219 = vpop.permute.xlu0 %1218
      %1220 = vrot.lane.b32.xlu0 %v427, 24
      %v1221 = vpop.permute.xlu0 %1220
      %1222 = vrot.lane.b32.xlu0 %v428, 24
      %v1223 = vpop.permute.xlu0 %1222
      %1224 = vrot.lane.b32.xlu0 %v429, 24
      %v1225 = vpop.permute.xlu0 %1224
      %1226 = vrot.lane.b32.xlu0 %v430, 24
      %v1227 = vpop.permute.xlu0 %1226
      %1228 = vrot.lane.b32.xlu0 %v431, 24
      %v1229 = vpop.permute.xlu0 %1228
      %1230 = vrot.lane.b32.xlu0 %v432, 24
      %v1231 = vpop.permute.xlu0 %1230
      %1232 = vrot.lane.b32.xlu0 %v433, 24
      %v1233 = vpop.permute.xlu0 %1232
      %1298 = vrot.lane.b32.xlu0 %v434, 28
      %v1299 = vpop.permute.xlu0 %1298
      %1300 = vrot.lane.b32.xlu0 %v435, 28
      %v1301 = vpop.permute.xlu0 %1300
      %1302 = vrot.lane.b32.xlu0 %v436, 28
      %v1303 = vpop.permute.xlu0 %1302
      %1304 = vrot.lane.b32.xlu0 %v437, 28
      %v1305 = vpop.permute.xlu0 %1304
      %1306 = vrot.lane.b32.xlu0 %v438, 28
      %v1307 = vpop.permute.xlu0 %1306
      %1308 = vrot.lane.b32.xlu0 %v439, 28
      %v1309 = vpop.permute.xlu0 %1308
      %1310 = vrot.lane.b32.xlu0 %v440, 28
      %v1311 = vpop.permute.xlu0 %1310
      %1312 = vrot.lane.b32.xlu0 %v441, 28
      %v1313 = vpop.permute.xlu0 %1312
      %1314 = vrot.lane.b32.xlu0 %v442, 28
      %v1315 = vpop.permute.xlu0 %1314
      %1316 = vrot.lane.b32.xlu0 %v443, 28
      %v1317 = vpop.permute.xlu0 %1316
      %1318 = vrot.lane.b32.xlu0 %v444, 28
      %v1319 = vpop.permute.xlu0 %1318
      %1320 = vrot.lane.b32.xlu0 %v445, 28
      %v1321 = vpop.permute.xlu0 %1320
      %1322 = vrot.lane.b32.xlu0 %v446, 28
      %v1323 = vpop.permute.xlu0 %1322
      %1324 = vrot.lane.b32.xlu0 %v447, 28
      %v1325 = vpop.permute.xlu0 %1324
      %1326 = vrot.lane.b32.xlu0 %v448, 28
      %v1327 = vpop.permute.xlu0 %1326
      %1328 = vrot.lane.b32.xlu0 %v449, 28
      %v1329 = vpop.permute.xlu0 %1328
      %1330 = vrot.lane.b32.xlu0 %v450, 28
      %v1331 = vpop.permute.xlu0 %1330
      %1332 = vrot.lane.b32.xlu0 %v451, 28
      %v1333 = vpop.permute.xlu0 %1332
      %1334 = vrot.lane.b32.xlu0 %v452, 28
      %v1335 = vpop.permute.xlu0 %1334
      %1336 = vrot.lane.b32.xlu0 %v453, 28
      %v1337 = vpop.permute.xlu0 %1336
      %1338 = vrot.lane.b32.xlu0 %v454, 28
      %v1339 = vpop.permute.xlu0 %1338
      %1340 = vrot.lane.b32.xlu0 %v455, 28
      %v1341 = vpop.permute.xlu0 %1340
      %1342 = vrot.lane.b32.xlu0 %v456, 28
      %v1343 = vpop.permute.xlu0 %1342
      %1344 = vrot.lane.b32.xlu0 %v457, 28
      %v1345 = vpop.permute.xlu0 %1344
      %1346 = vrot.lane.b32.xlu0 %v458, 28
      %v1347 = vpop.permute.xlu0 %1346
      %1348 = vrot.lane.b32.xlu0 %v459, 28
      %v1349 = vpop.permute.xlu0 %1348
      %1350 = vrot.lane.b32.xlu0 %v460, 28
      %v1351 = vpop.permute.xlu0 %1350
      %1352 = vrot.lane.b32.xlu0 %v461, 28
      %v1353 = vpop.permute.xlu0 %1352
      %1354 = vrot.lane.b32.xlu0 %v462, 28
      %v1355 = vpop.permute.xlu0 %1354
      %1356 = vrot.lane.b32.xlu0 %v463, 28
      %v1357 = vpop.permute.xlu0 %1356
      %1358 = vrot.lane.b32.xlu0 %v464, 28
      %v1359 = vpop.permute.xlu0 %1358
      %1360 = vrot.lane.b32.xlu0 %v465, 28
      %v1361 = vpop.permute.xlu0 %1360
      %1426 = vrot.lane.b32.xlu0 %v466, 32
      %v1427 = vpop.permute.xlu0 %1426
      %1428 = vrot.lane.b32.xlu0 %v467, 32
      %v1429 = vpop.permute.xlu0 %1428
      %1430 = vrot.lane.b32.xlu0 %v468, 32
      %v1431 = vpop.permute.xlu0 %1430
      %1432 = vrot.lane.b32.xlu0 %v469, 32
      %v1433 = vpop.permute.xlu0 %1432
      %1434 = vrot.lane.b32.xlu0 %v470, 32
      %v1435 = vpop.permute.xlu0 %1434
      %1436 = vrot.lane.b32.xlu0 %v471, 32
      %v1437 = vpop.permute.xlu0 %1436
      %1438 = vrot.lane.b32.xlu0 %v472, 32
      %v1439 = vpop.permute.xlu0 %1438
      %1440 = vrot.lane.b32.xlu0 %v473, 32
      %v1441 = vpop.permute.xlu0 %1440
      %1442 = vrot.lane.b32.xlu0 %v474, 32
      %v1443 = vpop.permute.xlu0 %1442
      %1444 = vrot.lane.b32.xlu0 %v475, 32
      %v1445 = vpop.permute.xlu0 %1444
      %1446 = vrot.lane.b32.xlu0 %v476, 32
      %v1447 = vpop.permute.xlu0 %1446
      %1448 = vrot.lane.b32.xlu0 %v477, 32
      %v1449 = vpop.permute.xlu0 %1448
      %1450 = vrot.lane.b32.xlu0 %v478, 32
      %v1451 = vpop.permute.xlu0 %1450
      %1452 = vrot.lane.b32.xlu0 %v479, 32
      %v1453 = vpop.permute.xlu0 %1452
      %1454 = vrot.lane.b32.xlu0 %v480, 32
      %v1455 = vpop.permute.xlu0 %1454
      %1456 = vrot.lane.b32.xlu0 %v481, 32
      %v1457 = vpop.permute.xlu0 %1456
      %1458 = vrot.lane.b32.xlu0 %v482, 32
      %v1459 = vpop.permute.xlu0 %1458
      %1460 = vrot.lane.b32.xlu0 %v483, 32
      %v1461 = vpop.permute.xlu0 %1460
      %1462 = vrot.lane.b32.xlu0 %v484, 32
      %v1463 = vpop.permute.xlu0 %1462
      %1464 = vrot.lane.b32.xlu0 %v485, 32
      %v1465 = vpop.permute.xlu0 %1464
      %1466 = vrot.lane.b32.xlu0 %v486, 32
      %v1467 = vpop.permute.xlu0 %1466
      %1468 = vrot.lane.b32.xlu0 %v487, 32
      %v1469 = vpop.permute.xlu0 %1468
      %1470 = vrot.lane.b32.xlu0 %v488, 32
      %v1471 = vpop.permute.xlu0 %1470
      %1472 = vrot.lane.b32.xlu0 %v489, 32
      %v1473 = vpop.permute.xlu0 %1472
      %1474 = vrot.lane.b32.xlu0 %v490, 32
      %v1475 = vpop.permute.xlu0 %1474
      %1476 = vrot.lane.b32.xlu0 %v491, 32
      %v1477 = vpop.permute.xlu0 %1476
      %1478 = vrot.lane.b32.xlu0 %v492, 32
      %v1479 = vpop.permute.xlu0 %1478
      %1480 = vrot.lane.b32.xlu0 %v493, 32
      %v1481 = vpop.permute.xlu0 %1480
      %1482 = vrot.lane.b32.xlu0 %v494, 32
      %v1483 = vpop.permute.xlu0 %1482
      %1484 = vrot.lane.b32.xlu0 %v495, 32
      %v1485 = vpop.permute.xlu0 %1484
      %1486 = vrot.lane.b32.xlu0 %v496, 32
      %v1487 = vpop.permute.xlu0 %1486
      %1488 = vrot.lane.b32.xlu0 %v497, 32
      %v1489 = vpop.permute.xlu0 %1488
      %vm1522 = vcmask 31744
      %v1523 = vsel %vm1522, %v208, %v531
      %v1524 = vsel %vm1522, %v209, %v533
      %v1525 = vsel %vm1522, %v210, %v535
      %v1526 = vsel %vm1522, %v211, %v537
      %v1527 = vsel %vm1522, %v212, %v539
      %v1528 = vsel %vm1522, %v213, %v541
      %v1529 = vsel %vm1522, %v214, %v543
      %v1530 = vsel %vm1522, %v215, %v545
      %v1531 = vsel %vm1522, %v216, %v547
      %v1532 = vsel %vm1522, %v217, %v549
      %v1533 = vsel %vm1522, %v218, %v551
      %v1534 = vsel %vm1522, %v219, %v553
      %v1535 = vsel %vm1522, %v220, %v555
      %v1536 = vsel %vm1522, %v221, %v557
      %v1537 = vsel %vm1522, %v222, %v559
      %v1538 = vsel %vm1522, %v223, %v561
      %v1539 = vsel %vm1522, %v224, %v563
      %v1540 = vsel %vm1522, %v225, %v565
      %v1541 = vsel %vm1522, %v226, %v567
      %v1542 = vsel %vm1522, %v227, %v569
      %v1543 = vsel %vm1522, %v228, %v571
      %v1544 = vsel %vm1522, %v229, %v573
      %v1545 = vsel %vm1522, %v230, %v575
      %v1546 = vsel %vm1522, %v231, %v577
      %v1547 = vsel %vm1522, %v232, %v579
      %v1548 = vsel %vm1522, %v233, %v581
      %v1549 = vsel %vm1522, %v234, %v583
      %v1550 = vsel %vm1522, %v235, %v585
      %v1551 = vsel %vm1522, %v236, %v587
      %v1552 = vsel %vm1522, %v237, %v589
      %v1553 = vsel %vm1522, %v238, %v591
      %v1554 = vsel %vm1522, %v239, %v593
      %vm1555 = vcmask 64512
      %v1556 = vsel %vm1555, %v1523, %v659
      %v1557 = vsel %vm1555, %v1524, %v661
      %v1558 = vsel %vm1555, %v1525, %v663
      %v1559 = vsel %vm1555, %v1526, %v665
      %v1560 = vsel %vm1555, %v1527, %v667
      %v1561 = vsel %vm1555, %v1528, %v669
      %v1562 = vsel %vm1555, %v1529, %v671
      %v1563 = vsel %vm1555, %v1530, %v673
      %v1564 = vsel %vm1555, %v1531, %v675
      %v1565 = vsel %vm1555, %v1532, %v677
      %v1566 = vsel %vm1555, %v1533, %v679
      %v1567 = vsel %vm1555, %v1534, %v681
      %v1568 = vsel %vm1555, %v1535, %v683
      %v1569 = vsel %vm1555, %v1536, %v685
      %v1570 = vsel %vm1555, %v1537, %v687
      %v1571 = vsel %vm1555, %v1538, %v689
      %v1572 = vsel %vm1555, %v1539, %v691
      %v1573 = vsel %vm1555, %v1540, %v693
      %v1574 = vsel %vm1555, %v1541, %v695
      %v1575 = vsel %vm1555, %v1542, %v697
      %v1576 = vsel %vm1555, %v1543, %v699
      %v1577 = vsel %vm1555, %v1544, %v701
      %v1578 = vsel %vm1555, %v1545, %v703
      %v1579 = vsel %vm1555, %v1546, %v705
      %v1580 = vsel %vm1555, %v1547, %v707
      %v1581 = vsel %vm1555, %v1548, %v709
      %v1582 = vsel %vm1555, %v1549, %v711
      %v1583 = vsel %vm1555, %v1550, %v713
      %v1584 = vsel %vm1555, %v1551, %v715
      %v1585 = vsel %vm1555, %v1552, %v717
      %v1586 = vsel %vm1555, %v1553, %v719
      %v1587 = vsel %vm1555, %v1554, %v721
      %vm1588 = vcmask 97280
      %v1589 = vsel %vm1588, %v1556, %v787
      %v1590 = vsel %vm1588, %v1557, %v789
      %v1591 = vsel %vm1588, %v1558, %v791
      %v1592 = vsel %vm1588, %v1559, %v793
      %v1593 = vsel %vm1588, %v1560, %v795
      %v1594 = vsel %vm1588, %v1561, %v797
      %v1595 = vsel %vm1588, %v1562, %v799
      %v1596 = vsel %vm1588, %v1563, %v801
      %v1597 = vsel %vm1588, %v1564, %v803
      %v1598 = vsel %vm1588, %v1565, %v805
      %v1599 = vsel %vm1588, %v1566, %v807
      %v1600 = vsel %vm1588, %v1567, %v809
      %v1601 = vsel %vm1588, %v1568, %v811
      %v1602 = vsel %vm1588, %v1569, %v813
      %v1603 = vsel %vm1588, %v1570, %v815
      %v1604 = vsel %vm1588, %v1571, %v817
      %v1605 = vsel %vm1588, %v1572, %v819
      %v1606 = vsel %vm1588, %v1573, %v821
      %v1607 = vsel %vm1588, %v1574, %v823
      %v1608 = vsel %vm1588, %v1575, %v825
      %v1609 = vsel %vm1588, %v1576, %v827
      %v1610 = vsel %vm1588, %v1577, %v829
      %v1611 = vsel %vm1588, %v1578, %v831
      %v1612 = vsel %vm1588, %v1579, %v833
      %v1613 = vsel %vm1588, %v1580, %v835
      %v1614 = vsel %vm1588, %v1581, %v837
      %v1615 = vsel %vm1588, %v1582, %v839
      %v1616 = vsel %vm1588, %v1583, %v841
      %v1617 = vsel %vm1588, %v1584, %v843
      %v1618 = vsel %vm1588, %v1585, %v845
      %v1619 = vsel %vm1588, %v1586, %v847
      %v1620 = vsel %vm1588, %v1587, %v849
      %vm1621 = vcmask 130048
      %v1622 = vsel %vm1621, %v1589, %v915
      %v1623 = vsel %vm1621, %v1590, %v917
      %v1624 = vsel %vm1621, %v1591, %v919
      %v1625 = vsel %vm1621, %v1592, %v921
      %v1626 = vsel %vm1621, %v1593, %v923
      %v1627 = vsel %vm1621, %v1594, %v925
      %v1628 = vsel %vm1621, %v1595, %v927
      %v1629 = vsel %vm1621, %v1596, %v929
      %v1630 = vsel %vm1621, %v1597, %v931
      %v1631 = vsel %vm1621, %v1598, %v933
      %v1632 = vsel %vm1621, %v1599, %v935
      %v1633 = vsel %vm1621, %v1600, %v937
      %v1634 = vsel %vm1621, %v1601, %v939
      %v1635 = vsel %vm1621, %v1602, %v941
      %v1636 = vsel %vm1621, %v1603, %v943
      %v1637 = vsel %vm1621, %v1604, %v945
      %v1638 = vsel %vm1621, %v1605, %v947
      %v1639 = vsel %vm1621, %v1606, %v949
      %v1640 = vsel %vm1621, %v1607, %v951
      %v1641 = vsel %vm1621, %v1608, %v953
      %v1642 = vsel %vm1621, %v1609, %v955
      %v1643 = vsel %vm1621, %v1610, %v957
      %v1644 = vsel %vm1621, %v1611, %v959
      %v1645 = vsel %vm1621, %v1612, %v961
      %v1646 = vsel %vm1621, %v1613, %v963
      %v1647 = vsel %vm1621, %v1614, %v965
      %v1648 = vsel %vm1621, %v1615, %v967
      %v1649 = vsel %vm1621, %v1616, %v969
      %v1650 = vsel %vm1621, %v1617, %v971
      %v1651 = vsel %vm1621, %v1618, %v973
      %v1652 = vsel %vm1621, %v1619, %v975
      %v1653 = vsel %vm1621, %v1620, %v977
      %vm1654 = vcmask 162816
      %v1655 = vsel %vm1654, %v1622, %v1043
      %v1656 = vsel %vm1654, %v1623, %v1045
      %v1657 = vsel %vm1654, %v1624, %v1047
      %v1658 = vsel %vm1654, %v1625, %v1049
      %v1659 = vsel %vm1654, %v1626, %v1051
      %v1660 = vsel %vm1654, %v1627, %v1053
      %v1661 = vsel %vm1654, %v1628, %v1055
      %v1662 = vsel %vm1654, %v1629, %v1057
      %v1663 = vsel %vm1654, %v1630, %v1059
      %v1664 = vsel %vm1654, %v1631, %v1061
      %v1665 = vsel %vm1654, %v1632, %v1063
      %v1666 = vsel %vm1654, %v1633, %v1065
      %v1667 = vsel %vm1654, %v1634, %v1067
      %v1668 = vsel %vm1654, %v1635, %v1069
      %v1669 = vsel %vm1654, %v1636, %v1071
      %v1670 = vsel %vm1654, %v1637, %v1073
      %v1671 = vsel %vm1654, %v1638, %v1075
      %v1672 = vsel %vm1654, %v1639, %v1077
      %v1673 = vsel %vm1654, %v1640, %v1079
      %v1674 = vsel %vm1654, %v1641, %v1081
      %v1675 = vsel %vm1654, %v1642, %v1083
      %v1676 = vsel %vm1654, %v1643, %v1085
      %v1677 = vsel %vm1654, %v1644, %v1087
      %v1678 = vsel %vm1654, %v1645, %v1089
      %v1679 = vsel %vm1654, %v1646, %v1091
      %v1680 = vsel %vm1654, %v1647, %v1093
      %v1681 = vsel %vm1654, %v1648, %v1095
      %v1682 = vsel %vm1654, %v1649, %v1097
      %v1683 = vsel %vm1654, %v1650, %v1099
      %v1684 = vsel %vm1654, %v1651, %v1101
      %v1685 = vsel %vm1654, %v1652, %v1103
      %v1686 = vsel %vm1654, %v1653, %v1105
      %vm1687 = vcmask 195584
      %v1688 = vsel %vm1687, %v1655, %v1171
      %v1689 = vsel %vm1687, %v1656, %v1173
      %v1690 = vsel %vm1687, %v1657, %v1175
      %v1691 = vsel %vm1687, %v1658, %v1177
      %v1692 = vsel %vm1687, %v1659, %v1179
      %v1693 = vsel %vm1687, %v1660, %v1181
      %v1694 = vsel %vm1687, %v1661, %v1183
      %v1695 = vsel %vm1687, %v1662, %v1185
      %v1696 = vsel %vm1687, %v1663, %v1187
      %v1697 = vsel %vm1687, %v1664, %v1189
      %v1698 = vsel %vm1687, %v1665, %v1191
      %v1699 = vsel %vm1687, %v1666, %v1193
      %v1700 = vsel %vm1687, %v1667, %v1195
      %v1701 = vsel %vm1687, %v1668, %v1197
      %v1702 = vsel %vm1687, %v1669, %v1199
      %v1703 = vsel %vm1687, %v1670, %v1201
      %v1704 = vsel %vm1687, %v1671, %v1203
      %v1705 = vsel %vm1687, %v1672, %v1205
      %v1706 = vsel %vm1687, %v1673, %v1207
      %v1707 = vsel %vm1687, %v1674, %v1209
      %v1708 = vsel %vm1687, %v1675, %v1211
      %v1709 = vsel %vm1687, %v1676, %v1213
      %v1710 = vsel %vm1687, %v1677, %v1215
      %v1711 = vsel %vm1687, %v1678, %v1217
      %v1712 = vsel %vm1687, %v1679, %v1219
      %v1713 = vsel %vm1687, %v1680, %v1221
      %v1714 = vsel %vm1687, %v1681, %v1223
      %v1715 = vsel %vm1687, %v1682, %v1225
      %v1716 = vsel %vm1687, %v1683, %v1227
      %v1717 = vsel %vm1687, %v1684, %v1229
      %v1718 = vsel %vm1687, %v1685, %v1231
      %v1719 = vsel %vm1687, %v1686, %v1233
      %vm1720 = vcmask 228352
      %v1721 = vsel %vm1720, %v1688, %v1299
      %v1722 = vsel %vm1720, %v1689, %v1301
      %v1723 = vsel %vm1720, %v1690, %v1303
      %v1724 = vsel %vm1720, %v1691, %v1305
      %v1725 = vsel %vm1720, %v1692, %v1307
      %v1726 = vsel %vm1720, %v1693, %v1309
      %v1727 = vsel %vm1720, %v1694, %v1311
      %v1728 = vsel %vm1720, %v1695, %v1313
      %v1729 = vsel %vm1720, %v1696, %v1315
      %v1730 = vsel %vm1720, %v1697, %v1317
      %v1731 = vsel %vm1720, %v1698, %v1319
      %v1732 = vsel %vm1720, %v1699, %v1321
      %v1733 = vsel %vm1720, %v1700, %v1323
      %v1734 = vsel %vm1720, %v1701, %v1325
      %v1735 = vsel %vm1720, %v1702, %v1327
      %v1736 = vsel %vm1720, %v1703, %v1329
      %v1737 = vsel %vm1720, %v1704, %v1331
      %v1738 = vsel %vm1720, %v1705, %v1333
      %v1739 = vsel %vm1720, %v1706, %v1335
      %v1740 = vsel %vm1720, %v1707, %v1337
      %v1741 = vsel %vm1720, %v1708, %v1339
      %v1742 = vsel %vm1720, %v1709, %v1341
      %v1743 = vsel %vm1720, %v1710, %v1343
      %v1744 = vsel %vm1720, %v1711, %v1345
      %v1745 = vsel %vm1720, %v1712, %v1347
      %v1746 = vsel %vm1720, %v1713, %v1349
      %v1747 = vsel %vm1720, %v1714, %v1351
      %v1748 = vsel %vm1720, %v1715, %v1353
      %v1749 = vsel %vm1720, %v1716, %v1355
      %v1750 = vsel %vm1720, %v1717, %v1357
      %v1751 = vsel %vm1720, %v1718, %v1359
      %v1752 = vsel %vm1720, %v1719, %v1361
      %vm1753 = vcmask 261120
      %v1754 = vsel %vm1753, %v1721, %v1427
      %v1755 = vsel %vm1753, %v1722, %v1429
      %v1756 = vsel %vm1753, %v1723, %v1431
      %v1757 = vsel %vm1753, %v1724, %v1433
      %v1758 = vsel %vm1753, %v1725, %v1435
      %v1759 = vsel %vm1753, %v1726, %v1437
      %v1760 = vsel %vm1753, %v1727, %v1439
      %v1761 = vsel %vm1753, %v1728, %v1441
      %v1762 = vsel %vm1753, %v1729, %v1443
      %v1763 = vsel %vm1753, %v1730, %v1445
      %v1764 = vsel %vm1753, %v1731, %v1447
      %v1765 = vsel %vm1753, %v1732, %v1449
      %v1766 = vsel %vm1753, %v1733, %v1451
      %v1767 = vsel %vm1753, %v1734, %v1453
      %v1768 = vsel %vm1753, %v1735, %v1455
      %v1769 = vsel %vm1753, %v1736, %v1457
      %v1770 = vsel %vm1753, %v1737, %v1459
      %v1771 = vsel %vm1753, %v1738, %v1461
      %v1772 = vsel %vm1753, %v1739, %v1463
      %v1773 = vsel %vm1753, %v1740, %v1465
      %v1774 = vsel %vm1753, %v1741, %v1467
      %v1775 = vsel %vm1753, %v1742, %v1469
      %v1776 = vsel %vm1753, %v1743, %v1471
      %v1777 = vsel %vm1753, %v1744, %v1473
      %v1778 = vsel %vm1753, %v1745, %v1475
      %v1779 = vsel %vm1753, %v1746, %v1477
      %v1780 = vsel %vm1753, %v1747, %v1479
      %v1781 = vsel %vm1753, %v1748, %v1481
      %v1782 = vsel %vm1753, %v1749, %v1483
      %v1783 = vsel %vm1753, %v1750, %v1485
      %v1784 = vsel %vm1753, %v1751, %v1487
      %v1785 = vsel %vm1753, %v1752, %v1489
      %v1786 = vld [vmem:[%s1] sm:$0xff]
      %v1787 = vld [vmem:[%s1 + $0x8] sm:$0xff]
      %v1788 = vld [vmem:[%s1 + $0x10] sm:$0xff]
      %v1789 = vld [vmem:[%s1 + $0x18] sm:$0xff]
      %v1790 = vld [vmem:[%s2] sm:$0xff]
      %v1791 = vld [vmem:[%s2 + $0x8] sm:$0xff]
      %v1792 = vld [vmem:[%s2 + $0x10] sm:$0xff]
      %v1793 = vld [vmem:[%s2 + $0x18] sm:$0xff]
      %1795 = vset.pattern.permute.xlu0 0
      %1796 = vperm.xlu0 %1795, %v1790
      %v1797 = vpop.permute.xlu0 %1796
      %1800 = vset.pattern.permute.xlu0 0
      %1801 = vperm.xlu0 %1800, %v1791
      %v1802 = vpop.permute.xlu0 %1801
      %1805 = vset.pattern.permute.xlu0 0
      %1806 = vperm.xlu0 %1805, %v1792
      %v1807 = vpop.permute.xlu0 %1806
      %1810 = vset.pattern.permute.xlu0 0
      %1811 = vperm.xlu0 %1810, %v1793
      %v1812 = vpop.permute.xlu0 %1811
      %vm1814 = vcmask 293888
      %v1816 = vsel %vm1814, %v1786, 0
      %v1819 = vsel %vm1814, %v1787, 0
      %v1822 = vsel %vm1814, %v1788, 0
      %v1825 = vsel %vm1814, %v1789, 0
      %v1828 = vsel %vm1814, %v1754, 0
      %v1831 = vsel %vm1814, %v1755, 0
      %v1834 = vsel %vm1814, %v1756, 0
      %v1837 = vsel %vm1814, %v1757, 0
      %v1840 = vsel %vm1814, %v1758, 0
      %v1843 = vsel %vm1814, %v1759, 0
      %v1846 = vsel %vm1814, %v1760, 0
      %v1849 = vsel %vm1814, %v1761, 0
      %v1852 = vsel %vm1814, %v1762, 0
      %v1855 = vsel %vm1814, %v1763, 0
      %v1858 = vsel %vm1814, %v1764, 0
      %v1861 = vsel %vm1814, %v1765, 0
      %v1864 = vsel %vm1814, %v1766, 0
      %v1867 = vsel %vm1814, %v1767, 0
      %v1870 = vsel %vm1814, %v1768, 0
      %v1873 = vsel %vm1814, %v1769, 0
      %v1876 = vsel %vm1814, %v1770, 0
      %v1879 = vsel %vm1814, %v1771, 0
      %v1882 = vsel %vm1814, %v1772, 0
      %v1885 = vsel %vm1814, %v1773, 0
      %v1888 = vsel %vm1814, %v1774, 0
      %v1891 = vsel %vm1814, %v1775, 0
      %v1894 = vsel %vm1814, %v1776, 0
      %v1897 = vsel %vm1814, %v1777, 0
      %v1900 = vsel %vm1814, %v1778, 0
      %v1903 = vsel %vm1814, %v1779, 0
      %v1906 = vsel %vm1814, %v1780, 0
      %v1909 = vsel %vm1814, %v1781, 0
      %v1912 = vsel %vm1814, %v1782, 0
      %v1915 = vsel %vm1814, %v1783, 0
      %v1918 = vsel %vm1814, %v1784, 0
      %v1921 = vsel %vm1814, %v1785, 0
      %1923 = vmatpush.xpose.msra.mxu0 %v1873
      %1924 = vmatpush.xpose.msra.mxu0 %v1870
      %1925 = vmatpush.xpose.msra.mxu0 %v1867
      %1926 = vmatpush.xpose.msra.mxu0 %v1864
      %1927 = vmatpush.xpose.msra.mxu0 %v1861
      %1928 = vmatpush.xpose.msra.mxu0 %v1858
      %1929 = vmatpush.xpose.msra.mxu0 %v1855
      %1930 = vmatpush.xpose.msra.mxu0 %v1852
      %1931 = vmatpush.xpose.msra.mxu0 %v1849
      %1932 = vmatpush.xpose.msra.mxu0 %v1846
      %1933 = vmatpush.xpose.msra.mxu0 %v1843
      %1934 = vmatpush.xpose.msra.mxu0 %v1840
      %1935 = vmatpush.xpose.msra.mxu0 %v1837
      %1936 = vmatpush.xpose.msra.mxu0 %v1834
      %1937 = vmatpush.xpose.msra.mxu0 %v1831
      %1938 = vmatpush.xpose.msra.mxu0 %v1828
      %1939 = vmatmul.f32.gmra.mxu0 %v1816
      %v1940 = vpop.f32.mrf.mxu0
      %v1941 = vadd.f32 %v1797, %v1940
      %1942 = vmatmul.f32.gmra.mxu0 %v1819
      %v1943 = vpop.f32.mrf.mxu0
      %v1944 = vadd.f32 %v1802, %v1943
      %1945 = vmatmul.f32.gmra.mxu0 %v1822
      %v1946 = vpop.f32.mrf.mxu0
      %v1947 = vadd.f32 %v1807, %v1946
      %1948 = vmatmul.f32.gmra.mxu0 %v1825
      %v1949 = vpop.f32.mrf.mxu0
      %v1950 = vadd.f32 %v1812, %v1949
      %1951 = vdwg.mxu0
      %1952 = vmatpush.xpose.msra.mxu0 %v1921
      %1953 = vmatpush.xpose.msra.mxu0 %v1918
      %1954 = vmatpush.xpose.msra.mxu0 %v1915
      %1955 = vmatpush.xpose.msra.mxu0 %v1912
      %1956 = vmatpush.xpose.msra.mxu0 %v1909
      %1957 = vmatpush.xpose.msra.mxu0 %v1906
      %1958 = vmatpush.xpose.msra.mxu0 %v1903
      %1959 = vmatpush.xpose.msra.mxu0 %v1900
      %1960 = vmatpush.xpose.msra.mxu0 %v1897
      %1961 = vmatpush.xpose.msra.mxu0 %v1894
      %1962 = vmatpush.xpose.msra.mxu0 %v1891
      %1963 = vmatpush.xpose.msra.mxu0 %v1888
      %1964 = vmatpush.xpose.msra.mxu0 %v1885
      %1965 = vmatpush.xpose.msra.mxu0 %v1882
      %1966 = vmatpush.xpose.msra.mxu0 %v1879
      %1967 = vmatpush.xpose.msra.mxu0 %v1876
      %1968 = vmatmul.f32.gmra.mxu0 %v1816
      %v1969 = vpop.f32.mrf.mxu0
      %v1970 = vadd.f32 %v1797, %v1969
      %1971 = vmatmul.f32.gmra.mxu0 %v1819
      %v1972 = vpop.f32.mrf.mxu0
      %v1973 = vadd.f32 %v1802, %v1972
      %1974 = vmatmul.f32.gmra.mxu0 %v1822
      %v1975 = vpop.f32.mrf.mxu0
      %v1976 = vadd.f32 %v1807, %v1975
      %1977 = vmatmul.f32.gmra.mxu0 %v1825
      %v1978 = vpop.f32.mrf.mxu0
      %v1979 = vadd.f32 %v1812, %v1978
      %1980 = vdwg.mxu0
      %v1981 = vmax.f32 %v1941, 0.0
      %v1982 = vmax.f32 %v1970, 0.0
      %v1983 = vmax.f32 %v1944, 0.0
      %v1984 = vmax.f32 %v1973, 0.0
      %v1985 = vmax.f32 %v1947, 0.0
      %v1986 = vmax.f32 %v1976, 0.0
      %v1987 = vmax.f32 %v1950, 0.0
      %v1988 = vmax.f32 %v1979, 0.0
      %1989 = vst [vmem:[%s206] sm:$0xff] %v1981
      %1990 = vst [vmem:[%s206 + $0x8] sm:$0xff] %v1982
      %1991 = vst [vmem:[%s206 + $0x10] sm:$0xff] %v1983
      %1992 = vst [vmem:[%s206 + $0x18] sm:$0xff] %v1984
      %1993 = vst [vmem:[%s206 + $0x20] sm:$0xff] %v1985
      %1994 = vst [vmem:[%s206 + $0x28] sm:$0xff] %v1986
      %1995 = vst [vmem:[%s206 + $0x30] sm:$0xff] %v1987
      %1996 = vst [vmem:[%s206 + $0x38] sm:$0xff] %v1988
      %s1997 = smul.u32 2, %s19
      %p1998 = scmp.lt.s32.totalorder %s18, 1
      %s1999 = scalar_select %p1998, %s18, 1
      %p2000 = scmp.lt.s32.totalorder %s1997, 1
      %s2001 = scalar_select %p2000, %s1997, 1
      %s2002 = smul.addr %s1999, 8
      %s2003 = sadd.s32 %s2001, %s2002
      %s2004 = smul.addr %s2003, 8
      %s2005 = scalar_lea.vmem %s3, %s2004
      // Predicated region
      $region33: #{unet_decoder_block.1} parent=31 // pred_check
        %p2006 = pneg %p116
      $region34: #{unet_decoder_block.1} parent=31 // pred_check_branch
        %2008 = sbr.rel (%p2006) target = $region36
      $region35: #{unet_decoder_block.1} parent=31 // pred_region
        %s2009 = smul.u32 2, %s19
      $region36: #{unet_decoder_block.1} parent=31 // pred_fallthru
        _
    $region32: #{unet_decoder_block.1} parent=5 // pred_fallthru
      _
    %p2010 = scmp.le.s32.totalorder 2, %s9
    // Predicated region
    $region37: #{unet_decoder_block.1} parent=5 // pred_check
      %p2011 = pneg %p2010
    $region38: #{unet_decoder_block.1} parent=5 // pred_check_branch
      %2013 = sbr.rel (%p2011) target = $region40
    $region39: #{unet_decoder_block.1} parent=5 // pred_region
      %s2014 = ssub.s32 %s9, 2
      // Predicated region
      $region41: #{unet_decoder_block.1} parent=39 // pred_check
        %p2015 = pneg %p122
      $region42: #{unet_decoder_block.1} parent=39 // pred_check_branch
        %2017 = sbr.rel (%p2015) target = $region44
      $region43: #{unet_decoder_block.1} parent=39 // pred_region
        %s2018 = smul.u32 2, %s21
        %p2019 = scmp.lt.s32.totalorder %s20, 1
        %s2020 = scalar_select %p2019, %s20, 1
        %p2021 = scmp.lt.s32.totalorder %s2018, 1
        %s2022 = scalar_select %p2021, %s2018, 1
        %s2023 = smul.addr %s2020, 8
        %s2024 = sadd.s32 %s2022, %s2023
        %s2025 = smul.addr %s2024, 8
        %s2026 = scalar_lea.vmem %s3, %s2025
      $region44: #{unet_decoder_block.1} parent=39 // pred_fallthru
        _
    $region40: #{unet_decoder_block.1} parent=5 // pred_fallthru
      _
  $region6: #{unet_decoder_block.1} parent=0 // loop_footer
    %s13 = sadd.s32 1, %s9
  $region7: #{unet_decoder_block.1} parent=0 // loop_footer_branch
    %8 = sbr.rel target = $region3
  $region8: #{unet_decoder_block.1} parent=0 // loop_exit
    _

</llo_original>
